<compile_context>
chip_gen: v6e
topology: v6e:2x2x1
jax: 0.10.0
libtpu: 0.0.40
codegen_flags: <defaults>
</compile_context>

<pallas_src>
import jax
import jax.numpy as jnp
import numpy as np
from jax.experimental import pallas as pl
from jax.experimental.pallas import tpu as pltpu

_LANES = 128


def _round_up(n: int, m: int) -> int:
    return ((n + m - 1) // m) * m


def _nn_idx(in_dim: int, tar_dim: int) -> np.ndarray:
    """PyTorch F.interpolate(mode='nearest') source indices for 1-D resize."""
    idx = np.floor(np.arange(tar_dim) * (in_dim / tar_dim)).astype(np.int64)
    return np.clip(idx, 0, in_dim - 1)


def _choose_tile_b(b_pad: int, *, target_steps: int = 2, max_tile: int = 1024) -> int:
    # ~2 grid steps total (one per v7x TensorCore; overhead-optimal on the
    # single-TC v5e/v6e too).  Rows a multiple of 8, capped so double-buffered
    # tiles + f32 intermediates stay far below the VMEM budget.
    tile = _round_up(pl.cdiv(b_pad, target_steps), 8)
    return max(8, min(tile, max_tile))


def dense_mlp_kernel(x_ref, w1big_ref, sbig_ref, w2_ref, b1_ref, bout_ref, o_ref):
    latent_pad = b1_ref.shape[1]
    out_dim = o_ref.shape[1]

    x = x_ref[...]                                       # [tb, in_dim] f32
    x_bf = x.astype(jnp.bfloat16)
    a_bf = jnp.maximum(x, 0.0).astype(jnp.bfloat16)      # ReLU in f32, bf16 for MXU

    # dot #1 (widened N): relu(x) @ [ W1 | W1[:, idx_lat->out] ]
    dot_w = jnp.dot(a_bf, w1big_ref[...], preferred_element_type=jnp.float32)
    # dot #2: x @ [ S_x->lat | S_x->out + S_x->lat->out ]  (all x skip paths)
    dot_s = jnp.dot(x_bf, sbig_ref[...], preferred_element_type=jnp.float32)

    # out1 = relu(x)@W1 + downsample(x, latent) + b1        (f32, lane-aligned slices)
    out1 = dot_w[:, :latent_pad] + dot_s[:, :latent_pad] + b1_ref[...]
    # NOTE: original computes activation(out1) but immediately overwrites it
    # (dead code) -> intentionally omitted.

    # out = out1@W2 + downsample(out1, out) + downsample(x, out) + b2
    #     = out1@W2 + dot_w[:, lat:] + dot_s[:, lat:] + (b2 + b1[idx_lat->out])
    out = (jnp.dot(out1.astype(jnp.bfloat16), w2_ref[...],
                   preferred_element_type=jnp.float32)
           + dot_w[:, latent_pad:] + dot_s[:, latent_pad:] + bout_ref[...])

    o_ref[...] = out[:, :out_dim].astype(o_ref.dtype)


def dense_mlp_pallas(x, w1, b1, w2, b2, latent_dim, out_dim, *, tile_b=None):
    B, in_dim = x.shape
    latent_pad = _round_up(latent_dim, _LANES)
    out_pad = _round_up(out_dim, _LANES)
    n_big = latent_pad + out_pad

    # --- nearest-neighbour selection indices (one-time, host side).
    idx_xl = _nn_idx(in_dim, latent_dim)          # x      -> latent
    idx_lo = _nn_idx(latent_dim, out_dim)         # latent -> out
    idx_xo = _nn_idx(in_dim, out_dim)             # x      -> out

    # --- fold everything into three resident weight matrices (bf16 MXU side).
    # W1big : [in_dim, latent_pad + out_pad] = [ W1 | W1[:, idx_lo] ]
    w1big = jnp.zeros((in_dim, n_big), jnp.float32)
    w1big = w1big.at[:, :latent_dim].set(w1)
    w1big = w1big.at[:, latent_pad:latent_pad + out_dim].set(w1[:, idx_lo])
    w1big = w1big.astype(jnp.bfloat16)

    # Sbig : [in_dim, latent_pad + out_pad] = [ S_x->lat | S_x->out + S_x->lat->out ]
    sbig_np = np.zeros((in_dim, n_big), np.float32)
    np.add.at(sbig_np, (idx_xl, np.arange(latent_dim)), 1.0)
    np.add.at(sbig_np, (idx_xo, latent_pad + np.arange(out_dim)), 1.0)
    np.add.at(sbig_np, (idx_xl[idx_lo], latent_pad + np.arange(out_dim)), 1.0)
    sbig = jnp.asarray(sbig_np, jnp.bfloat16)     # entries in {0,1,2}: exact in bf16

    # W2 padded (NOT folded with S_lat->out -> keeps skip routing exact).
    w2p = jnp.zeros((latent_pad, out_pad), jnp.float32)
    w2p = w2p.at[:latent_dim, :out_dim].set(w2).astype(jnp.bfloat16)

    b1p = jnp.zeros((1, latent_pad), jnp.float32).at[0, :latent_dim].set(b1)
    boutp = jnp.zeros((1, out_pad), jnp.float32).at[0, :out_dim].set(b2 + b1[idx_lo])

    # --- batch padding / tiling (robust: cdiv grid + row padding).
    x = x.astype(jnp.float32)
    b8 = _round_up(B, 8)
    if tile_b is None:
        tile_b = _choose_tile_b(b8)
    grid_b = pl.cdiv(b8, tile_b)
    B_pad = grid_b * tile_b
    if B_pad != B:
        x = jnp.pad(x, ((0, B_pad - B), (0, 0)))

    res = lambda shape: pl.BlockSpec(shape, lambda i: (0, 0))   # resident weights:
    # constant block index -> Pallas DMAs them into VMEM only once across the grid.

    out = pl.pallas_call(
        dense_mlp_kernel,
        out_shape=jax.ShapeDtypeStruct((B_pad, out_dim), jnp.float32),
        grid_spec=pltpu.PrefetchScalarGridSpec(
            num_scalar_prefetch=0,
            grid=(grid_b,),
            in_specs=[
                pl.BlockSpec((tile_b, in_dim), lambda i: (i, 0)),   # x tile (pipelined)
                res((in_dim, n_big)),                                # W1big  (bf16)
                res((in_dim, n_big)),                                # Sbig   (bf16)
                res((latent_pad, out_pad)),                          # W2     (bf16)
                res((1, latent_pad)),                                # b1     (f32)
                res((1, out_pad)),                                   # b2+b1[idx] (f32)
            ],
            out_specs=pl.BlockSpec((tile_b, out_dim), lambda i: (i, 0)),
        ),
        compiler_params=pltpu.CompilerParams(
            dimension_semantics=("parallel",),      # 2 steps -> both v7x TensorCores
            vmem_limit_bytes=32 * 1024 * 1024,      # explicit; comfortable on v5e/v6e/v7x
        ),
    )(x, w1big, sbig, w2p, b1p, boutp)

    return out if B_pad == B else out[:B]


def dense_mlp_ref(x, w1, b1, w2, b2, latent_dim, out_dim):
    """Pure-JAX f32 reference mirroring the torch forward exactly."""
    def downsample_nn(v, tar_dim):
        if v.shape[1] == tar_dim:
            return v
        idx = _nn_idx(v.shape[1], tar_dim)
        return v[:, idx]

    a = jnp.maximum(x, 0.0)
    out1 = a @ w1 + b1
    out1 = out1 + downsample_nn(x, latent_dim)
    _ = jnp.maximum(out1, 0.0)          # dead code in the original module
    out2 = out1 @ w2 + b2
    out2 = out2 + downsample_nn(out1, out_dim)
    return out2 + downsample_nn(x, out_dim)


if __name__ == "__main__":
    # Small problem, but big enough in batch to exercise real tiling
    # (tile_b=512 -> grid=(2,), one step per v7x TensorCore) and pipelining.
    B, in_dim, latent_dim, out_dim = 1024, 64, 32, 16

    key = jax.random.PRNGKey(0)
    kx, k1, k2, k3, k4 = jax.random.split(key, 5)

    x = jax.random.normal(kx, (B, in_dim), dtype=jnp.float32)

    # Original module zero-initializes linear1/linear2; use small deterministic
    # random params so the matmul path is actually exercised.
    w1 = 0.1 * jax.random.normal(k1, (in_dim, latent_dim), dtype=jnp.float32)
    b1 = 0.1 * jax.random.normal(k2, (latent_dim,), dtype=jnp.float32)
    w2 = 0.1 * jax.random.normal(k3, (latent_dim, out_dim), dtype=jnp.float32)
    b2 = 0.1 * jax.random.normal(k4, (out_dim,), dtype=jnp.float32)

    out = dense_mlp_pallas(x, w1, b1, w2, b2, latent_dim, out_dim)
    out = jax.block_until_ready(out)

    ref = dense_mlp_ref(x, w1, b1, w2, b2, latent_dim, out_dim)
    # Tolerance vs. the pure-f32 reference: MXU operands are bf16 (f32 acc);
    # skip routing uses exact one-hot matrices so the error is just bf16(x)/
    # bf16(out1) rounding on the operands (~0.4% rel) — tighter than v2.
    np.testing.assert_allclose(np.asarray(out), np.asarray(ref),
                               rtol=2e-2, atol=5e-2)
    print("KERNEL_OK")
</pallas_src>

<mosaic_0001>
module attributes {stable_mosaic.version = 11 : i64} {
  func.func @dense_mlp_kernel(%arg0: i32, %arg1: memref<512x64xf32, #tpu.memory_space<vmem>>, %arg2: memref<64x256xbf16, #tpu.memory_space<vmem>>, %arg3: memref<64x256xbf16, #tpu.memory_space<vmem>>, %arg4: memref<128x128xbf16, #tpu.memory_space<vmem>>, %arg5: memref<1x128xf32, #tpu.memory_space<vmem>>, %arg6: memref<1x128xf32, #tpu.memory_space<vmem>>, %arg7: memref<512x16xf32, #tpu.memory_space<vmem>>) attributes {dimension_semantics = [#tpu.dimension_semantics<parallel>], iteration_bounds = array<i64: 2>, scalar_prefetch = 0 : i64, scratch_operands = 0 : i64, tpu.core_type = #tpu.core_type<tc>, window_params = [{transform_indices = @transform_0, window_bounds = array<i64: 512, 64>}, {pipeline_mode = #tpu.pipeline_mode<synchronous>, transform_indices = @transform_1, window_bounds = array<i64: 64, 256>}, {pipeline_mode = #tpu.pipeline_mode<synchronous>, transform_indices = @transform_2, window_bounds = array<i64: 64, 256>}, {pipeline_mode = #tpu.pipeline_mode<synchronous>, transform_indices = @transform_3, window_bounds = array<i64: 128, 128>}, {pipeline_mode = #tpu.pipeline_mode<synchronous>, transform_indices = @transform_4, window_bounds = array<i64: 1, 128>}, {pipeline_mode = #tpu.pipeline_mode<synchronous>, transform_indices = @transform_5, window_bounds = array<i64: 1, 128>}, {transform_indices = @transform_6, window_bounds = array<i64: 512, 16>}]} {
    %c0 = arith.constant 0 : index
    %c0_0 = arith.constant 0 : index
    %0 = vector.load %arg1[%c0, %c0_0] : memref<512x64xf32, #tpu.memory_space<vmem>>, vector<512x64xf32>
    %1 = arith.truncf %0 : vector<512x64xf32> to vector<512x64xbf16>
    %cst = arith.constant 0.000000e+00 : f32
    %2 = vector.broadcast %cst : f32 to vector<512x64xf32>
    %3 = arith.maximumf %0, %2 : vector<512x64xf32>
    %4 = arith.truncf %3 : vector<512x64xf32> to vector<512x64xbf16>
    %c0_1 = arith.constant 0 : index
    %c0_2 = arith.constant 0 : index
    %5 = vector.load %arg2[%c0_1, %c0_2] : memref<64x256xbf16, #tpu.memory_space<vmem>>, vector<64x256xbf16>
    %cst_3 = arith.constant dense<0.000000e+00> : vector<512x256xf32>
    %6 = tpu.matmul %4, %5, %cst_3 {dimension_numbers = #tpu.dot_dimension_numbers<[1], [0], [0], [1], [0, 0, 1, 1], [], []>} : vector<512x64xbf16>, vector<64x256xbf16>, vector<512x256xf32> -> vector<512x256xf32>
    %c0_4 = arith.constant 0 : index
    %c0_5 = arith.constant 0 : index
    %7 = vector.load %arg3[%c0_4, %c0_5] : memref<64x256xbf16, #tpu.memory_space<vmem>>, vector<64x256xbf16>
    %cst_6 = arith.constant dense<0.000000e+00> : vector<512x256xf32>
    %8 = tpu.matmul %1, %7, %cst_6 {dimension_numbers = #tpu.dot_dimension_numbers<[1], [0], [0], [1], [0, 0, 1, 1], [], []>} : vector<512x64xbf16>, vector<64x256xbf16>, vector<512x256xf32> -> vector<512x256xf32>
    %9 = vector.extract_strided_slice %6 {offsets = [0, 0], sizes = [512, 128], strides = [1, 1]} : vector<512x256xf32> to vector<512x128xf32>
    %10 = vector.extract_strided_slice %8 {offsets = [0, 0], sizes = [512, 128], strides = [1, 1]} : vector<512x256xf32> to vector<512x128xf32>
    %11 = arith.addf %9, %10 : vector<512x128xf32>
    %c0_7 = arith.constant 0 : index
    %c0_8 = arith.constant 0 : index
    %12 = vector.load %arg5[%c0_7, %c0_8] : memref<1x128xf32, #tpu.memory_space<vmem>>, vector<1x128xf32>
    %13 = vector.broadcast %12 : vector<1x128xf32> to vector<512x128xf32>
    %14 = arith.addf %11, %13 : vector<512x128xf32>
    %15 = arith.truncf %14 : vector<512x128xf32> to vector<512x128xbf16>
    %c0_9 = arith.constant 0 : index
    %c0_10 = arith.constant 0 : index
    %16 = vector.load %arg4[%c0_9, %c0_10] : memref<128x128xbf16, #tpu.memory_space<vmem>>, vector<128x128xbf16>
    %cst_11 = arith.constant dense<0.000000e+00> : vector<512x128xf32>
    %17 = tpu.matmul %15, %16, %cst_11 {dimension_numbers = #tpu.dot_dimension_numbers<[1], [0], [0], [1], [0, 0, 1, 1], [], []>} : vector<512x128xbf16>, vector<128x128xbf16>, vector<512x128xf32> -> vector<512x128xf32>
    %18 = vector.extract_strided_slice %6 {offsets = [0, 128], sizes = [512, 128], strides = [1, 1]} : vector<512x256xf32> to vector<512x128xf32>
    %19 = arith.addf %17, %18 : vector<512x128xf32>
    %20 = vector.extract_strided_slice %8 {offsets = [0, 128], sizes = [512, 128], strides = [1, 1]} : vector<512x256xf32> to vector<512x128xf32>
    %21 = arith.addf %19, %20 : vector<512x128xf32>
    %c0_12 = arith.constant 0 : index
    %c0_13 = arith.constant 0 : index
    %22 = vector.load %arg6[%c0_12, %c0_13] : memref<1x128xf32, #tpu.memory_space<vmem>>, vector<1x128xf32>
    %23 = vector.broadcast %22 : vector<1x128xf32> to vector<512x128xf32>
    %24 = arith.addf %21, %23 : vector<512x128xf32>
    %25 = vector.extract_strided_slice %24 {offsets = [0, 0], sizes = [512, 16], strides = [1, 1]} : vector<512x128xf32> to vector<512x16xf32>
    %c0_14 = arith.constant 0 : index
    %c0_15 = arith.constant 0 : index
    %26 = vector.load %arg7[%c0_14, %c0_15] : memref<512x16xf32, #tpu.memory_space<vmem>>, vector<512x16xf32>
    tpu.vector_store %arg7[%c0_14, %c0_15], %25 {strides = array<i32>} : memref<512x16xf32, #tpu.memory_space<vmem>>, vector<512x16xf32>,
    return
  }
  func.func @transform_0(%arg0: i32) -> (i32, i32) {
    %c0_i32 = arith.constant 0 : i32
    %c0_i32_0 = arith.constant 0 : i32
    return %arg0, %c0_i32 : i32, i32
  }
  func.func @transform_1(%arg0: i32) -> (i32, i32) {
    %c0_i32 = arith.constant 0 : i32
    %c0_i32_0 = arith.constant 0 : i32
    %c0_i32_1 = arith.constant 0 : i32
    return %c0_i32, %c0_i32_0 : i32, i32
  }
  func.func @transform_2(%arg0: i32) -> (i32, i32) {
    %c0_i32 = arith.constant 0 : i32
    %c0_i32_0 = arith.constant 0 : i32
    %c0_i32_1 = arith.constant 0 : i32
    return %c0_i32, %c0_i32_0 : i32, i32
  }
  func.func @transform_3(%arg0: i32) -> (i32, i32) {
    %c0_i32 = arith.constant 0 : i32
    %c0_i32_0 = arith.constant 0 : i32
    %c0_i32_1 = arith.constant 0 : i32
    return %c0_i32, %c0_i32_0 : i32, i32
  }
  func.func @transform_4(%arg0: i32) -> (i32, i32) {
    %c0_i32 = arith.constant 0 : i32
    %c0_i32_0 = arith.constant 0 : i32
    %c0_i32_1 = arith.constant 0 : i32
    return %c0_i32, %c0_i32_0 : i32, i32
  }
  func.func @transform_5(%arg0: i32) -> (i32, i32) {
    %c0_i32 = arith.constant 0 : i32
    %c0_i32_0 = arith.constant 0 : i32
    %c0_i32_1 = arith.constant 0 : i32
    return %c0_i32, %c0_i32_0 : i32, i32
  }
  func.func @transform_6(%arg0: i32) -> (i32, i32) {
    %c0_i32 = arith.constant 0 : i32
    %c0_i32_0 = arith.constant 0 : i32
    return %arg0, %c0_i32 : i32, i32
  }
}

</mosaic_0001>

<llo_original>
// kernel: tpu_custom_call.1
$region0: #{tpu_custom_call.1}
  #allocation0 [shape = 'u32[]', space=smem, size = 0x4, offset = 0x4, fixed_abs, tag = 'smem constant byte address 0x4 - core index']
  #allocation1 [shape = 'u32[144,128]{1,0:T(1,128)}', space=vmem, size = 0x12000, scoped, tag = 'internal scratch']
  %s0 = inlined_call_operand.vmem [shape: f32[1024,64], index: 0, kind: input, shape index: {}]
  %s1 = inlined_call_operand.vmem [shape: bf16[64,256], index: 1, kind: input, shape index: {}]
  %s2 = inlined_call_operand.vmem [shape: bf16[64,256], index: 2, kind: input, shape index: {}]
  %s3 = inlined_call_operand.vmem [shape: bf16[128,128], index: 3, kind: input, shape index: {}]
  %s4 = inlined_call_operand.vmem [shape: f32[1,128], index: 4, kind: input, shape index: {}]
  %s5 = inlined_call_operand.vmem [shape: f32[1,128], index: 5, kind: input, shape index: {}]
  %s6 = inlined_call_operand.vmem [shape: f32[1024,16], index: 6, kind: output, shape index: {}]
  %s7 = sld [smem:[#allocation0]]
  $region57: #{tpu_custom_call.1} parent=0
    _
  %s9 = ssub.s32 1, %s7
  %s10 = scalar_select 0, %s9, %s7
  loop: start=0, step=1, limit=4
  $region2: #{tpu_custom_call.1} parent=0 // loop_pre_header
    _
  $region3: #{tpu_custom_call.1} parent=0 // loop_header
    %s12 = sphi 0, %s16
    %p13 = scmp.ge.s32.totalorder %s12, 4
    %s22 = sphi 0, %s24
    %s25 = sphi 0, %s22
    %s26 = sphi 0, %s25
    %s42 = sphi 0, %s26
    %s46 = sphi 0, %s46
    %s48 = sphi 0, %s46
    %s49 = sphi 0, %s48
    %s63 = sphi 0, %s49
    %s67 = sphi 0, %s67
    %s69 = sphi 0, %s67
    %s70 = sphi 0, %s69
    %s84 = sphi 0, %s70
    %s88 = sphi 0, %s88
    %s90 = sphi 0, %s88
    %s91 = sphi 0, %s90
    %s105 = sphi 0, %s91
    %s109 = sphi 0, %s109
    %s111 = sphi 0, %s109
    %s112 = sphi 0, %s111
    %s126 = sphi 0, %s112
    %s130 = sphi 0, %s130
    %s132 = sphi 0, %s130
    %s133 = sphi 0, %s132
    %s147 = sphi 0, %s133
    %s153 = sphi 0, %s155
    %s156 = sphi 0, %s153
    %s157 = sphi 0, %s156
    %s173 = sphi 0, %s157
  $region4: #{tpu_custom_call.1} parent=0 // loop_header_branch
    %15 = sbr.rel (%p13) target = $region8
  $region5: #{tpu_custom_call.1} parent=0 // loop_body
    %s17 = ssub.s32 %s12, 1
    %s18 = ssub.s32 %s12, 2
    %s19 = sadd.s32 %s12, 1
    %s20 = ssub.s32 %s12, %s19
    %p21 = scmp.eq.s32.totalorder %s20, 0
    %s23 = sadd.s32 %s22, 1
    %s24 = scalar_select %p21, %s22, %s23
    %p27 = pneg %p21
    %p28 = scmp.eq.s32.totalorder %s12, 1
    %p29 = por %p27, %p28
    %p30 = scmp.ne.s32.totalorder %s22, %s25
    %p31 = scmp.eq.s32.totalorder %s12, 0
    %p32 = por %p30, %p31
    %p33 = scmp.ne.s32.totalorder %s22, %s25
    %p34 = scmp.eq.s32.totalorder %s17, 1
    %p35 = por %p33, %p34
    %p36 = scmp.ne.s32.totalorder %s25, %s26
    %p37 = scmp.eq.s32.totalorder %s17, 0
    %p38 = por %p36, %p37
    %p39 = scmp.ne.s32.totalorder %s25, %s26
    %p40 = scmp.eq.s32.totalorder %s18, 1
    %p41 = por %p39, %p40
    %p43 = scmp.ne.s32.totalorder %s26, %s42
    %p44 = scmp.eq.s32.totalorder %s18, 0
    %p45 = por %p43, %p44
    %s47 = sadd.s32 %s46, 1
    %p50 = scmp.eq.s32.totalorder %s12, 1
    %p51 = scmp.ne.s32.totalorder %s46, %s48
    %p52 = scmp.eq.s32.totalorder %s12, 0
    %p53 = por %p51, %p52
    %p54 = scmp.ne.s32.totalorder %s46, %s48
    %p55 = scmp.eq.s32.totalorder %s17, 1
    %p56 = por %p54, %p55
    %p57 = scmp.ne.s32.totalorder %s48, %s49
    %p58 = scmp.eq.s32.totalorder %s17, 0
    %p59 = por %p57, %p58
    %p60 = scmp.ne.s32.totalorder %s48, %s49
    %p61 = scmp.eq.s32.totalorder %s18, 1
    %p62 = por %p60, %p61
    %p64 = scmp.ne.s32.totalorder %s49, %s63
    %p65 = scmp.eq.s32.totalorder %s18, 0
    %p66 = por %p64, %p65
    %s68 = sadd.s32 %s67, 1
    %p71 = scmp.eq.s32.totalorder %s12, 1
    %p72 = scmp.ne.s32.totalorder %s67, %s69
    %p73 = scmp.eq.s32.totalorder %s12, 0
    %p74 = por %p72, %p73
    %p75 = scmp.ne.s32.totalorder %s67, %s69
    %p76 = scmp.eq.s32.totalorder %s17, 1
    %p77 = por %p75, %p76
    %p78 = scmp.ne.s32.totalorder %s69, %s70
    %p79 = scmp.eq.s32.totalorder %s17, 0
    %p80 = por %p78, %p79
    %p81 = scmp.ne.s32.totalorder %s69, %s70
    %p82 = scmp.eq.s32.totalorder %s18, 1
    %p83 = por %p81, %p82
    %p85 = scmp.ne.s32.totalorder %s70, %s84
    %p86 = scmp.eq.s32.totalorder %s18, 0
    %p87 = por %p85, %p86
    %s89 = sadd.s32 %s88, 1
    %p92 = scmp.eq.s32.totalorder %s12, 1
    %p93 = scmp.ne.s32.totalorder %s88, %s90
    %p94 = scmp.eq.s32.totalorder %s12, 0
    %p95 = por %p93, %p94
    %p96 = scmp.ne.s32.totalorder %s88, %s90
    %p97 = scmp.eq.s32.totalorder %s17, 1
    %p98 = por %p96, %p97
    %p99 = scmp.ne.s32.totalorder %s90, %s91
    %p100 = scmp.eq.s32.totalorder %s17, 0
    %p101 = por %p99, %p100
    %p102 = scmp.ne.s32.totalorder %s90, %s91
    %p103 = scmp.eq.s32.totalorder %s18, 1
    %p104 = por %p102, %p103
    %p106 = scmp.ne.s32.totalorder %s91, %s105
    %p107 = scmp.eq.s32.totalorder %s18, 0
    %p108 = por %p106, %p107
    %s110 = sadd.s32 %s109, 1
    %p113 = scmp.eq.s32.totalorder %s12, 1
    %p114 = scmp.ne.s32.totalorder %s109, %s111
    %p115 = scmp.eq.s32.totalorder %s12, 0
    %p116 = por %p114, %p115
    %p117 = scmp.ne.s32.totalorder %s109, %s111
    %p118 = scmp.eq.s32.totalorder %s17, 1
    %p119 = por %p117, %p118
    %p120 = scmp.ne.s32.totalorder %s111, %s112
    %p121 = scmp.eq.s32.totalorder %s17, 0
    %p122 = por %p120, %p121
    %p123 = scmp.ne.s32.totalorder %s111, %s112
    %p124 = scmp.eq.s32.totalorder %s18, 1
    %p125 = por %p123, %p124
    %p127 = scmp.ne.s32.totalorder %s112, %s126
    %p128 = scmp.eq.s32.totalorder %s18, 0
    %p129 = por %p127, %p128
    %s131 = sadd.s32 %s130, 1
    %p134 = scmp.eq.s32.totalorder %s12, 1
    %p135 = scmp.ne.s32.totalorder %s130, %s132
    %p136 = scmp.eq.s32.totalorder %s12, 0
    %p137 = por %p135, %p136
    %p138 = scmp.ne.s32.totalorder %s130, %s132
    %p139 = scmp.eq.s32.totalorder %s17, 1
    %p140 = por %p138, %p139
    %p141 = scmp.ne.s32.totalorder %s132, %s133
    %p142 = scmp.eq.s32.totalorder %s17, 0
    %p143 = por %p141, %p142
    %p144 = scmp.ne.s32.totalorder %s132, %s133
    %p145 = scmp.eq.s32.totalorder %s18, 1
    %p146 = por %p144, %p145
    %p148 = scmp.ne.s32.totalorder %s133, %s147
    %p149 = scmp.eq.s32.totalorder %s18, 0
    %p150 = por %p148, %p149
    %s151 = ssub.s32 %s12, %s19
    %p152 = scmp.eq.s32.totalorder %s151, 0
    %s154 = sadd.s32 %s153, 1
    %s155 = scalar_select %p152, %s153, %s154
    %p158 = pneg %p152
    %p159 = scmp.eq.s32.totalorder %s12, 1
    %p160 = por %p158, %p159
    %p161 = scmp.ne.s32.totalorder %s153, %s156
    %p162 = scmp.eq.s32.totalorder %s12, 0
    %p163 = por %p161, %p162
    %p164 = scmp.ne.s32.totalorder %s153, %s156
    %p165 = scmp.eq.s32.totalorder %s17, 1
    %p166 = por %p164, %p165
    %p167 = scmp.ne.s32.totalorder %s156, %s157
    %p168 = scmp.eq.s32.totalorder %s17, 0
    %p169 = por %p167, %p168
    %p170 = scmp.ne.s32.totalorder %s156, %s157
    %p171 = scmp.eq.s32.totalorder %s18, 1
    %p172 = por %p170, %p171
    %p174 = scmp.ne.s32.totalorder %s157, %s173
    %p175 = scmp.eq.s32.totalorder %s18, 0
    %p176 = por %p174, %p175
    %p177 = scmp.le.s32.totalorder 1, %s12
    %p178 = scmp.lt.s32.totalorder %s12, 3
    %p179 = pnand %p177, %p178
    %p180 = pneg %p179
    // Predicated region
    $region9: #{tpu_custom_call.1} parent=5 // pred_check
      _
    $region10: #{tpu_custom_call.1} parent=5 // pred_check_branch
      %182 = sbr.rel (%p179) target = $region12
    $region11: #{tpu_custom_call.1} parent=5 // pred_region
      %s183 = ssub.s32 %s12, 1
      // Predicated region
      $region13: #{tpu_custom_call.1} parent=11 // pred_check
        %p184 = pneg %p59
      $region14: #{tpu_custom_call.1} parent=11 // pred_check_branch
        %186 = sbr.rel (%p184) target = $region16
      $region15: #{tpu_custom_call.1} parent=11 // pred_region
        _
      $region16: #{tpu_custom_call.1} parent=11 // pred_fallthru
        _
      // Predicated region
      $region17: #{tpu_custom_call.1} parent=11 // pred_check
        %p187 = pneg %p80
      $region18: #{tpu_custom_call.1} parent=11 // pred_check_branch
        %189 = sbr.rel (%p187) target = $region20
      $region19: #{tpu_custom_call.1} parent=11 // pred_region
        _
      $region20: #{tpu_custom_call.1} parent=11 // pred_fallthru
        _
      // Predicated region
      $region21: #{tpu_custom_call.1} parent=11 // pred_check
        %p190 = pneg %p101
      $region22: #{tpu_custom_call.1} parent=11 // pred_check_branch
        %192 = sbr.rel (%p190) target = $region24
      $region23: #{tpu_custom_call.1} parent=11 // pred_region
        _
      $region24: #{tpu_custom_call.1} parent=11 // pred_fallthru
        _
      // Predicated region
      $region25: #{tpu_custom_call.1} parent=11 // pred_check
        %p193 = pneg %p122
      $region26: #{tpu_custom_call.1} parent=11 // pred_check_branch
        %195 = sbr.rel (%p193) target = $region28
      $region27: #{tpu_custom_call.1} parent=11 // pred_region
        _
      $region28: #{tpu_custom_call.1} parent=11 // pred_fallthru
        _
      // Predicated region
      $region29: #{tpu_custom_call.1} parent=11 // pred_check
        %p196 = pneg %p143
      $region30: #{tpu_custom_call.1} parent=11 // pred_check_branch
        %198 = sbr.rel (%p196) target = $region32
      $region31: #{tpu_custom_call.1} parent=11 // pred_region
        _
      $region32: #{tpu_custom_call.1} parent=11 // pred_fallthru
        _
    $region12: #{tpu_custom_call.1} parent=5 // pred_fallthru
      _
    %p199 = scmp.lt.s32.totalorder %s12, 2
    // Predicated region
    $region33: #{tpu_custom_call.1} parent=5 // pred_check
      %p200 = pneg %p199
    $region34: #{tpu_custom_call.1} parent=5 // pred_check_branch
      %202 = sbr.rel (%p200) target = $region36
    $region35: #{tpu_custom_call.1} parent=5 // pred_region
      // Predicated region
      $region37: #{tpu_custom_call.1} parent=35 // pred_check
        %p203 = pneg %p32
      $region38: #{tpu_custom_call.1} parent=35 // pred_check_branch
        %205 = sbr.rel (%p203) target = $region40
      $region39: #{tpu_custom_call.1} parent=35 // pred_region
        %s206 = smul.u32 64, %s12
        %p207 = scmp.lt.s32.totalorder %s206, 127
        %s208 = scalar_select %p207, %s206, 127
        %s209 = smul.addr %s208, 8
        %s210 = scalar_lea.vmem %s0, %s209
        %s211 = smul.u32 64, %s12
      $region40: #{tpu_custom_call.1} parent=35 // pred_fallthru
        _
    $region36: #{tpu_custom_call.1} parent=5 // pred_fallthru
      _
    %p212 = scmp.le.s32.totalorder 1, %s12
    %p213 = scmp.lt.s32.totalorder %s12, 3
    %p214 = pnand %p212, %p213
    %p215 = pneg %p214
    // Predicated region
    $region41: #{tpu_custom_call.1} parent=5 // pred_check
      _
    $region42: #{tpu_custom_call.1} parent=5 // pred_check_branch
      %217 = sbr.rel (%p214) target = $region44
    $region43: #{tpu_custom_call.1} parent=5 // pred_region
      %s218 = ssub.s32 %s12, 1
      %s219 = smul.u32 64, %s17
      %p220 = scmp.lt.s32.totalorder %s219, 127
      %s221 = scalar_select %p220, %s219, 127
      %s222 = smul.addr %s221, 8
      %s223 = scalar_lea.vmem %s0, %s222
      %p224 = pneg %p38
      %p225 = pneg %p35
      %p226 = pneg %p59
      %p227 = pneg %p56
      %p228 = pneg %p80
      %p229 = pneg %p77
      %p230 = pneg %p101
      %p231 = pneg %p98
      %p232 = pneg %p122
      %p233 = pneg %p119
      %p234 = pneg %p143
      %p235 = pneg %p140
      %p236 = pneg %p169
      %p237 = pneg %p166
      %s238 = smul.u32 64, %s17
      %p239 = scmp.lt.s32.totalorder %s238, 127
      %s240 = scalar_select %p239, %s238, 127
      %s241 = smul.addr %s240, 8
      %s242 = scalar_lea.vmem %s6, %s241
      %s243 = smul.u32 64, %s17
      %p244 = scmp.lt.s32.totalorder %s243, 127
      %s245 = scalar_select %p244, %s243, 127
      %s246 = smul.addr %s245, 8
      %s247 = scalar_lea.vmem %s0, %s246
      %s248 = smul.u32 64, %s17
      %s249 = smul.u32 64, %s17
      %p250 = scmp.lt.s32.totalorder %s249, 127
      %s251 = scalar_select %p250, %s249, 127
      %s252 = smul.addr %s251, 8
      %s253 = scalar_lea.vmem %s6, %s252
      %s254 = smul.u32 64, %s17
      %v256 = vld [vmem:[%s247] sm:$0xff]
      %v257 = vld [vmem:[%s247 + $0x8] sm:$0xff]
      %v258 = vld [vmem:[%s247 + $0x10] sm:$0xff]
      %v259 = vld [vmem:[%s247 + $0x18] sm:$0xff]
      %v260 = vld [vmem:[%s247 + $0x20] sm:$0xff]
      %v261 = vld [vmem:[%s247 + $0x28] sm:$0xff]
      %v262 = vld [vmem:[%s247 + $0x30] sm:$0xff]
      %v263 = vld [vmem:[%s247 + $0x38] sm:$0xff]
      %v264 = vld [vmem:[%s247 + $0x40] sm:$0xff]
      %v265 = vld [vmem:[%s247 + $0x48] sm:$0xff]
      %v266 = vld [vmem:[%s247 + $0x50] sm:$0xff]
      %v267 = vld [vmem:[%s247 + $0x58] sm:$0xff]
      %v268 = vld [vmem:[%s247 + $0x60] sm:$0xff]
      %v269 = vld [vmem:[%s247 + $0x68] sm:$0xff]
      %v270 = vld [vmem:[%s247 + $0x70] sm:$0xff]
      %v271 = vld [vmem:[%s247 + $0x78] sm:$0xff]
      %v272 = vld [vmem:[%s247 + $0x80] sm:$0xff]
      %v273 = vld [vmem:[%s247 + $0x88] sm:$0xff]
      %v274 = vld [vmem:[%s247 + $0x90] sm:$0xff]
      %v275 = vld [vmem:[%s247 + $0x98] sm:$0xff]
      %v276 = vld [vmem:[%s247 + $0xa0] sm:$0xff]
      %v277 = vld [vmem:[%s247 + $0xa8] sm:$0xff]
      %v278 = vld [vmem:[%s247 + $0xb0] sm:$0xff]
      %v279 = vld [vmem:[%s247 + $0xb8] sm:$0xff]
      %v280 = vld [vmem:[%s247 + $0xc0] sm:$0xff]
      %v281 = vld [vmem:[%s247 + $0xc8] sm:$0xff]
      %v282 = vld [vmem:[%s247 + $0xd0] sm:$0xff]
      %v283 = vld [vmem:[%s247 + $0xd8] sm:$0xff]
      %v284 = vld [vmem:[%s247 + $0xe0] sm:$0xff]
      %v285 = vld [vmem:[%s247 + $0xe8] sm:$0xff]
      %v286 = vld [vmem:[%s247 + $0xf0] sm:$0xff]
      %v287 = vld [vmem:[%s247 + $0xf8] sm:$0xff]
      %v288 = vld [vmem:[%s247 + $0x100] sm:$0xff]
      %v289 = vld [vmem:[%s247 + $0x108] sm:$0xff]
      %v290 = vld [vmem:[%s247 + $0x110] sm:$0xff]
      %v291 = vld [vmem:[%s247 + $0x118] sm:$0xff]
      %v292 = vld [vmem:[%s247 + $0x120] sm:$0xff]
      %v293 = vld [vmem:[%s247 + $0x128] sm:$0xff]
      %v294 = vld [vmem:[%s247 + $0x130] sm:$0xff]
      %v295 = vld [vmem:[%s247 + $0x138] sm:$0xff]
      %v296 = vld [vmem:[%s247 + $0x140] sm:$0xff]
      %v297 = vld [vmem:[%s247 + $0x148] sm:$0xff]
      %v298 = vld [vmem:[%s247 + $0x150] sm:$0xff]
      %v299 = vld [vmem:[%s247 + $0x158] sm:$0xff]
      %v300 = vld [vmem:[%s247 + $0x160] sm:$0xff]
      %v301 = vld [vmem:[%s247 + $0x168] sm:$0xff]
      %v302 = vld [vmem:[%s247 + $0x170] sm:$0xff]
      %v303 = vld [vmem:[%s247 + $0x178] sm:$0xff]
      %v304 = vld [vmem:[%s247 + $0x180] sm:$0xff]
      %v305 = vld [vmem:[%s247 + $0x188] sm:$0xff]
      %v306 = vld [vmem:[%s247 + $0x190] sm:$0xff]
      %v307 = vld [vmem:[%s247 + $0x198] sm:$0xff]
      %v308 = vld [vmem:[%s247 + $0x1a0] sm:$0xff]
      %v309 = vld [vmem:[%s247 + $0x1a8] sm:$0xff]
      %v310 = vld [vmem:[%s247 + $0x1b0] sm:$0xff]
      %v311 = vld [vmem:[%s247 + $0x1b8] sm:$0xff]
      %v312 = vld [vmem:[%s247 + $0x1c0] sm:$0xff]
      %v313 = vld [vmem:[%s247 + $0x1c8] sm:$0xff]
      %v314 = vld [vmem:[%s247 + $0x1d0] sm:$0xff]
      %v315 = vld [vmem:[%s247 + $0x1d8] sm:$0xff]
      %v316 = vld [vmem:[%s247 + $0x1e0] sm:$0xff]
      %v317 = vld [vmem:[%s247 + $0x1e8] sm:$0xff]
      %v318 = vld [vmem:[%s247 + $0x1f0] sm:$0xff]
      %v319 = vld [vmem:[%s247 + $0x1f8] sm:$0xff]
      %v320 = vpack.c.bf16 %v257, %v256
      %v321 = vpack.c.bf16 %v259, %v258
      %v322 = vpack.c.bf16 %v261, %v260
      %v323 = vpack.c.bf16 %v263, %v262
      %v324 = vpack.c.bf16 %v265, %v264
      %v325 = vpack.c.bf16 %v267, %v266
      %v326 = vpack.c.bf16 %v269, %v268
      %v327 = vpack.c.bf16 %v271, %v270
      %v328 = vpack.c.bf16 %v273, %v272
      %v329 = vpack.c.bf16 %v275, %v274
      %v330 = vpack.c.bf16 %v277, %v276
      %v331 = vpack.c.bf16 %v279, %v278
      %v332 = vpack.c.bf16 %v281, %v280
      %v333 = vpack.c.bf16 %v283, %v282
      %v334 = vpack.c.bf16 %v285, %v284
      %v335 = vpack.c.bf16 %v287, %v286
      %v336 = vpack.c.bf16 %v289, %v288
      %v337 = vpack.c.bf16 %v291, %v290
      %v338 = vpack.c.bf16 %v293, %v292
      %v339 = vpack.c.bf16 %v295, %v294
      %v340 = vpack.c.bf16 %v297, %v296
      %v341 = vpack.c.bf16 %v299, %v298
      %v342 = vpack.c.bf16 %v301, %v300
      %v343 = vpack.c.bf16 %v303, %v302
      %v344 = vpack.c.bf16 %v305, %v304
      %v345 = vpack.c.bf16 %v307, %v306
      %v346 = vpack.c.bf16 %v309, %v308
      %v347 = vpack.c.bf16 %v311, %v310
      %v348 = vpack.c.bf16 %v313, %v312
      %v349 = vpack.c.bf16 %v315, %v314
      %v350 = vpack.c.bf16 %v317, %v316
      %v351 = vpack.c.bf16 %v319, %v318
      %v352 = vmax.f32 %v256, 0.0
      %v353 = vmax.f32 %v257, 0.0
      %v354 = vmax.f32 %v258, 0.0
      %v355 = vmax.f32 %v259, 0.0
      %v356 = vmax.f32 %v260, 0.0
      %v357 = vmax.f32 %v261, 0.0
      %v358 = vmax.f32 %v262, 0.0
      %v359 = vmax.f32 %v263, 0.0
      %v360 = vmax.f32 %v264, 0.0
      %v361 = vmax.f32 %v265, 0.0
      %v362 = vmax.f32 %v266, 0.0
      %v363 = vmax.f32 %v267, 0.0
      %v364 = vmax.f32 %v268, 0.0
      %v365 = vmax.f32 %v269, 0.0
      %v366 = vmax.f32 %v270, 0.0
      %v367 = vmax.f32 %v271, 0.0
      %v368 = vmax.f32 %v272, 0.0
      %v369 = vmax.f32 %v273, 0.0
      %v370 = vmax.f32 %v274, 0.0
      %v371 = vmax.f32 %v275, 0.0
      %v372 = vmax.f32 %v276, 0.0
      %v373 = vmax.f32 %v277, 0.0
      %v374 = vmax.f32 %v278, 0.0
      %v375 = vmax.f32 %v279, 0.0
      %v376 = vmax.f32 %v280, 0.0
      %v377 = vmax.f32 %v281, 0.0
      %v378 = vmax.f32 %v282, 0.0
      %v379 = vmax.f32 %v283, 0.0
      %v380 = vmax.f32 %v284, 0.0
      %v381 = vmax.f32 %v285, 0.0
      %v382 = vmax.f32 %v286, 0.0
      %v383 = vmax.f32 %v287, 0.0
      %v384 = vmax.f32 %v288, 0.0
      %v385 = vmax.f32 %v289, 0.0
      %v386 = vmax.f32 %v290, 0.0
      %v387 = vmax.f32 %v291, 0.0
      %v388 = vmax.f32 %v292, 0.0
      %v389 = vmax.f32 %v293, 0.0
      %v390 = vmax.f32 %v294, 0.0
      %v391 = vmax.f32 %v295, 0.0
      %v392 = vmax.f32 %v296, 0.0
      %v393 = vmax.f32 %v297, 0.0
      %v394 = vmax.f32 %v298, 0.0
      %v395 = vmax.f32 %v299, 0.0
      %v396 = vmax.f32 %v300, 0.0
      %v397 = vmax.f32 %v301, 0.0
      %v398 = vmax.f32 %v302, 0.0
      %v399 = vmax.f32 %v303, 0.0
      %v400 = vmax.f32 %v304, 0.0
      %v401 = vmax.f32 %v305, 0.0
      %v402 = vmax.f32 %v306, 0.0
      %v403 = vmax.f32 %v307, 0.0
      %v404 = vmax.f32 %v308, 0.0
      %v405 = vmax.f32 %v309, 0.0
      %v406 = vmax.f32 %v310, 0.0
      %v407 = vmax.f32 %v311, 0.0
      %v408 = vmax.f32 %v312, 0.0
      %v409 = vmax.f32 %v313, 0.0
      %v410 = vmax.f32 %v314, 0.0
      %v411 = vmax.f32 %v315, 0.0
      %v412 = vmax.f32 %v316, 0.0
      %v413 = vmax.f32 %v317, 0.0
      %v414 = vmax.f32 %v318, 0.0
      %v415 = vmax.f32 %v319, 0.0
      %v416 = vpack.c.bf16 %v353, %v352
      %v417 = vpack.c.bf16 %v355, %v354
      %v418 = vpack.c.bf16 %v357, %v356
      %v419 = vpack.c.bf16 %v359, %v358
      %v420 = vpack.c.bf16 %v361, %v360
      %v421 = vpack.c.bf16 %v363, %v362
      %v422 = vpack.c.bf16 %v365, %v364
      %v423 = vpack.c.bf16 %v367, %v366
      %v424 = vpack.c.bf16 %v369, %v368
      %v425 = vpack.c.bf16 %v371, %v370
      %v426 = vpack.c.bf16 %v373, %v372
      %v427 = vpack.c.bf16 %v375, %v374
      %v428 = vpack.c.bf16 %v377, %v376
      %v429 = vpack.c.bf16 %v379, %v378
      %v430 = vpack.c.bf16 %v381, %v380
      %v431 = vpack.c.bf16 %v383, %v382
      %v432 = vpack.c.bf16 %v385, %v384
      %v433 = vpack.c.bf16 %v387, %v386
      %v434 = vpack.c.bf16 %v389, %v388
      %v435 = vpack.c.bf16 %v391, %v390
      %v436 = vpack.c.bf16 %v393, %v392
      %v437 = vpack.c.bf16 %v395, %v394
      %v438 = vpack.c.bf16 %v397, %v396
      %v439 = vpack.c.bf16 %v399, %v398
      %v440 = vpack.c.bf16 %v401, %v400
      %v441 = vpack.c.bf16 %v403, %v402
      %v442 = vpack.c.bf16 %v405, %v404
      %v443 = vpack.c.bf16 %v407, %v406
      %v444 = vpack.c.bf16 %v409, %v408
      %v445 = vpack.c.bf16 %v411, %v410
      %v446 = vpack.c.bf16 %v413, %v412
      %v447 = vpack.c.bf16 %v415, %v414
      %v448 = vld [vmem:[%s1] sm:$0xff]
      %v449 = vld [vmem:[%s1 + $0x8] sm:$0xff]
      %v450 = vld [vmem:[%s1 + $0x10] sm:$0xff]
      %v451 = vld [vmem:[%s1 + $0x18] sm:$0xff]
      %v452 = vld [vmem:[%s1 + $0x20] sm:$0xff]
      %v453 = vld [vmem:[%s1 + $0x28] sm:$0xff]
      %v454 = vld [vmem:[%s1 + $0x30] sm:$0xff]
      %v455 = vld [vmem:[%s1 + $0x38] sm:$0xff]
      %v464 = vunpack.c.l.b16 %v448
      %v465 = vunpack.c.h.b16 %v448
      %v466 = vunpack.c.l.b16 %v449
      %v467 = vunpack.c.h.b16 %v449
      %v468 = vunpack.c.l.b16 %v450
      %v469 = vunpack.c.h.b16 %v450
      %v470 = vunpack.c.l.b16 %v451
      %v471 = vunpack.c.h.b16 %v451
      %v472 = vunpack.c.l.b16 %v452
      %v473 = vunpack.c.h.b16 %v452
      %v474 = vunpack.c.l.b16 %v453
      %v475 = vunpack.c.h.b16 %v453
      %v476 = vunpack.c.l.b16 %v454
      %v477 = vunpack.c.h.b16 %v454
      %v478 = vunpack.c.l.b16 %v455
      %v479 = vunpack.c.h.b16 %v455
      %v480 = vpack.c.b16 %v466, %v464
      %v481 = vpack.c.b16 %v467, %v465
      %v482 = vpack.c.b16 %v470, %v468
      %v483 = vpack.c.b16 %v471, %v469
      %v484 = vpack.c.b16 %v474, %v472
      %v485 = vpack.c.b16 %v475, %v473
      %v486 = vpack.c.b16 %v478, %v476
      %v487 = vpack.c.b16 %v479, %v477
      %vm496 = vcmask 523264
      %v498 = vsel %vm496, %v416, 0
      %v501 = vsel %vm496, %v417, 0
      %v504 = vsel %vm496, %v418, 0
      %v507 = vsel %vm496, %v419, 0
      %v510 = vsel %vm496, %v420, 0
      %v513 = vsel %vm496, %v421, 0
      %v516 = vsel %vm496, %v422, 0
      %v519 = vsel %vm496, %v423, 0
      %v522 = vsel %vm496, %v424, 0
      %v525 = vsel %vm496, %v425, 0
      %v528 = vsel %vm496, %v426, 0
      %v531 = vsel %vm496, %v427, 0
      %v534 = vsel %vm496, %v428, 0
      %v537 = vsel %vm496, %v429, 0
      %v540 = vsel %vm496, %v430, 0
      %v543 = vsel %vm496, %v431, 0
      %v546 = vsel %vm496, %v432, 0
      %v549 = vsel %vm496, %v433, 0
      %v552 = vsel %vm496, %v434, 0
      %v555 = vsel %vm496, %v435, 0
      %v558 = vsel %vm496, %v436, 0
      %v561 = vsel %vm496, %v437, 0
      %v564 = vsel %vm496, %v438, 0
      %v567 = vsel %vm496, %v439, 0
      %v570 = vsel %vm496, %v440, 0
      %v573 = vsel %vm496, %v441, 0
      %v576 = vsel %vm496, %v442, 0
      %v579 = vsel %vm496, %v443, 0
      %v582 = vsel %vm496, %v444, 0
      %v585 = vsel %vm496, %v445, 0
      %v588 = vsel %vm496, %v446, 0
      %v591 = vsel %vm496, %v447, 0
      %593 = vmatprep.subr.bf16.mxu0 0
      %594 = vmatpush1.bf16.msra.mxu0 0
      %595 = vmatprep.subr.bf16.mxu0 0
      %596 = vmatpush1.bf16.msra.mxu0 0
      %597 = vmatprep.subr.bf16.mxu0 0
      %598 = vmatpush1.bf16.msra.mxu0 0
      %599 = vmatprep.subr.bf16.mxu0 0
      %600 = vmatpush1.bf16.msra.mxu0 0
      %601 = vmatprep.subr.bf16.mxu0 %v487
      %602 = vmatpush1.bf16.msra.mxu0 %v486
      %603 = vmatprep.subr.bf16.mxu0 %v485
      %604 = vmatpush1.bf16.msra.mxu0 %v484
      %605 = vmatprep.subr.bf16.mxu0 %v483
      %606 = vmatpush1.bf16.msra.mxu0 %v482
      %607 = vmatprep.subr.bf16.mxu0 %v481
      %608 = vmatpush1.bf16.msra.mxu0 %v480
      %609 = vmatprep.subr.bf16.mxu0 0
      %610 = vmatpush2.bf16.msra.mxu0 0
      %611 = vmatprep.subr.bf16.mxu0 0
      %612 = vmatpush2.bf16.msra.mxu0 0
      %613 = vmatprep.subr.bf16.mxu0 0
      %614 = vmatpush2.bf16.msra.mxu0 0
      %615 = vmatprep.subr.bf16.mxu0 0
      %616 = vmatpush2.bf16.msra.mxu0 0
      %617 = vmatprep.subr.bf16.mxu0 0
      %618 = vmatpush2.bf16.msra.mxu0 0
      %619 = vmatprep.subr.bf16.mxu0 0
      %620 = vmatpush2.bf16.msra.mxu0 0
      %621 = vmatprep.subr.bf16.mxu0 0
      %622 = vmatpush2.bf16.msra.mxu0 0
      %623 = vmatprep.subr.bf16.mxu0 0
      %624 = vmatpush2.bf16.msra.mxu0 0
      %625 = vmatprep.mubr.bf16.mxu0 0
      %626 = vmatmul.mubr.bf16.gmra.mxu0 %v498
      %v627 = vpop.f32.mrf.mxu0
      %v628 = vadd.f32 0.0, %v627
      %v629 = vpop.f32.mrf.mxu0
      %v630 = vadd.f32 0.0, %v629
      %v631 = vpop.f32.mrf.mxu0
      %v632 = vadd.f32 0.0, %v631
      %v633 = vpop.f32.mrf.mxu0
      %v634 = vadd.f32 0.0, %v633
      %635 = vmatprep.mubr.bf16.mxu0 0
      %636 = vmatmul.mubr.bf16.gmra.mxu0 %v501
      %v637 = vpop.f32.mrf.mxu0
      %v638 = vadd.f32 0.0, %v637
      %v639 = vpop.f32.mrf.mxu0
      %v640 = vadd.f32 0.0, %v639
      %v641 = vpop.f32.mrf.mxu0
      %v642 = vadd.f32 0.0, %v641
      %v643 = vpop.f32.mrf.mxu0
      %v644 = vadd.f32 0.0, %v643
      %645 = vmatprep.mubr.bf16.mxu0 0
      %646 = vmatmul.mubr.bf16.gmra.mxu0 %v504
      %v647 = vpop.f32.mrf.mxu0
      %v648 = vadd.f32 0.0, %v647
      %v649 = vpop.f32.mrf.mxu0
      %v650 = vadd.f32 0.0, %v649
      %v651 = vpop.f32.mrf.mxu0
      %v652 = vadd.f32 0.0, %v651
      %v653 = vpop.f32.mrf.mxu0
      %v654 = vadd.f32 0.0, %v653
      %655 = vmatprep.mubr.bf16.mxu0 0
      %656 = vmatmul.mubr.bf16.gmra.mxu0 %v507
      %v657 = vpop.f32.mrf.mxu0
      %v658 = vadd.f32 0.0, %v657
      %v659 = vpop.f32.mrf.mxu0
      %v660 = vadd.f32 0.0, %v659
      %v661 = vpop.f32.mrf.mxu0
      %v662 = vadd.f32 0.0, %v661
      %v663 = vpop.f32.mrf.mxu0
      %v664 = vadd.f32 0.0, %v663
      %665 = vmatprep.mubr.bf16.mxu0 0
      %666 = vmatmul.mubr.bf16.gmra.mxu0 %v510
      %v667 = vpop.f32.mrf.mxu0
      %v668 = vadd.f32 0.0, %v667
      %v669 = vpop.f32.mrf.mxu0
      %v670 = vadd.f32 0.0, %v669
      %v671 = vpop.f32.mrf.mxu0
      %v672 = vadd.f32 0.0, %v671
      %v673 = vpop.f32.mrf.mxu0
      %v674 = vadd.f32 0.0, %v673
      %675 = vmatprep.mubr.bf16.mxu0 0
      %676 = vmatmul.mubr.bf16.gmra.mxu0 %v513
      %v677 = vpop.f32.mrf.mxu0
      %v678 = vadd.f32 0.0, %v677
      %v679 = vpop.f32.mrf.mxu0
      %v680 = vadd.f32 0.0, %v679
      %v681 = vpop.f32.mrf.mxu0
      %v682 = vadd.f32 0.0, %v681
      %v683 = vpop.f32.mrf.mxu0
      %v684 = vadd.f32 0.0, %v683
      %685 = vmatprep.mubr.bf16.mxu0 0
      %686 = vmatmul.mubr.bf16.gmra.mxu0 %v516
      %v687 = vpop.f32.mrf.mxu0
      %v688 = vadd.f32 0.0, %v687
      %v689 = vpop.f32.mrf.mxu0
      %v690 = vadd.f32 0.0, %v689
      %v691 = vpop.f32.mrf.mxu0
      %v692 = vadd.f32 0.0, %v691
      %v693 = vpop.f32.mrf.mxu0
      %v694 = vadd.f32 0.0, %v693
      %695 = vmatprep.mubr.bf16.mxu0 0
      %696 = vmatmul.mubr.bf16.gmra.mxu0 %v519
      %v697 = vpop.f32.mrf.mxu0
      %v698 = vadd.f32 0.0, %v697
      %v699 = vpop.f32.mrf.mxu0
      %v700 = vadd.f32 0.0, %v699
      %v701 = vpop.f32.mrf.mxu0
      %v702 = vadd.f32 0.0, %v701
      %v703 = vpop.f32.mrf.mxu0
      %v704 = vadd.f32 0.0, %v703
      %705 = vmatprep.mubr.bf16.mxu0 0
      %706 = vmatmul.mubr.bf16.gmra.mxu0 %v522
      %v707 = vpop.f32.mrf.mxu0
      %v708 = vadd.f32 0.0, %v707
      %v709 = vpop.f32.mrf.mxu0
      %v710 = vadd.f32 0.0, %v709
      %v711 = vpop.f32.mrf.mxu0
      %v712 = vadd.f32 0.0, %v711
      %v713 = vpop.f32.mrf.mxu0
      %v714 = vadd.f32 0.0, %v713
      %715 = vmatprep.mubr.bf16.mxu0 0
      %716 = vmatmul.mubr.bf16.gmra.mxu0 %v525
      %v717 = vpop.f32.mrf.mxu0
      %v718 = vadd.f32 0.0, %v717
      %v719 = vpop.f32.mrf.mxu0
      %v720 = vadd.f32 0.0, %v719
      %v721 = vpop.f32.mrf.mxu0
      %v722 = vadd.f32 0.0, %v721
      %v723 = vpop.f32.mrf.mxu0
      %v724 = vadd.f32 0.0, %v723
      %725 = vmatprep.mubr.bf16.mxu0 0
      %726 = vmatmul.mubr.bf16.gmra.mxu0 %v528
      %v727 = vpop.f32.mrf.mxu0
      %v728 = vadd.f32 0.0, %v727
      %v729 = vpop.f32.mrf.mxu0
      %v730 = vadd.f32 0.0, %v729
      %v731 = vpop.f32.mrf.mxu0
      %v732 = vadd.f32 0.0, %v731
      %v733 = vpop.f32.mrf.mxu0
      %v734 = vadd.f32 0.0, %v733
      %735 = vmatprep.mubr.bf16.mxu0 0
      %736 = vmatmul.mubr.bf16.gmra.mxu0 %v531
      %v737 = vpop.f32.mrf.mxu0
      %v738 = vadd.f32 0.0, %v737
      %v739 = vpop.f32.mrf.mxu0
      %v740 = vadd.f32 0.0, %v739
      %v741 = vpop.f32.mrf.mxu0
      %v742 = vadd.f32 0.0, %v741
      %v743 = vpop.f32.mrf.mxu0
      %v744 = vadd.f32 0.0, %v743
      %745 = vmatprep.mubr.bf16.mxu0 0
      %746 = vmatmul.mubr.bf16.gmra.mxu0 %v534
      %v747 = vpop.f32.mrf.mxu0
      %v748 = vadd.f32 0.0, %v747
      %v749 = vpop.f32.mrf.mxu0
      %v750 = vadd.f32 0.0, %v749
      %v751 = vpop.f32.mrf.mxu0
      %v752 = vadd.f32 0.0, %v751
      %v753 = vpop.f32.mrf.mxu0
      %v754 = vadd.f32 0.0, %v753
      %755 = vmatprep.mubr.bf16.mxu0 0
      %756 = vmatmul.mubr.bf16.gmra.mxu0 %v537
      %v757 = vpop.f32.mrf.mxu0
      %v758 = vadd.f32 0.0, %v757
      %v759 = vpop.f32.mrf.mxu0
      %v760 = vadd.f32 0.0, %v759
      %v761 = vpop.f32.mrf.mxu0
      %v762 = vadd.f32 0.0, %v761
      %v763 = vpop.f32.mrf.mxu0
      %v764 = vadd.f32 0.0, %v763
      %765 = vmatprep.mubr.bf16.mxu0 0
      %766 = vmatmul.mubr.bf16.gmra.mxu0 %v540
      %v767 = vpop.f32.mrf.mxu0
      %v768 = vadd.f32 0.0, %v767
      %v769 = vpop.f32.mrf.mxu0
      %v770 = vadd.f32 0.0, %v769
      %v771 = vpop.f32.mrf.mxu0
      %v772 = vadd.f32 0.0, %v771
      %v773 = vpop.f32.mrf.mxu0
      %v774 = vadd.f32 0.0, %v773
      %775 = vmatprep.mubr.bf16.mxu0 0
      %776 = vmatmul.mubr.bf16.gmra.mxu0 %v543
      %v777 = vpop.f32.mrf.mxu0
      %v778 = vadd.f32 0.0, %v777
      %v779 = vpop.f32.mrf.mxu0
      %v780 = vadd.f32 0.0, %v779
      %v781 = vpop.f32.mrf.mxu0
      %v782 = vadd.f32 0.0, %v781
      %v783 = vpop.f32.mrf.mxu0
      %v784 = vadd.f32 0.0, %v783
      %785 = vmatprep.mubr.bf16.mxu0 0
      %786 = vmatmul.mubr.bf16.gmra.mxu0 %v546
      %v787 = vpop.f32.mrf.mxu0
      %v788 = vadd.f32 0.0, %v787
      %v789 = vpop.f32.mrf.mxu0
      %v790 = vadd.f32 0.0, %v789
      %v791 = vpop.f32.mrf.mxu0
      %v792 = vadd.f32 0.0, %v791
      %v793 = vpop.f32.mrf.mxu0
      %v794 = vadd.f32 0.0, %v793
      %795 = vmatprep.mubr.bf16.mxu0 0
      %796 = vmatmul.mubr.bf16.gmra.mxu0 %v549
      %v797 = vpop.f32.mrf.mxu0
      %v798 = vadd.f32 0.0, %v797
      %v799 = vpop.f32.mrf.mxu0
      %v800 = vadd.f32 0.0, %v799
      %v801 = vpop.f32.mrf.mxu0
      %v802 = vadd.f32 0.0, %v801
      %v803 = vpop.f32.mrf.mxu0
      %v804 = vadd.f32 0.0, %v803
      %805 = vmatprep.mubr.bf16.mxu0 0
      %806 = vmatmul.mubr.bf16.gmra.mxu0 %v552
      %v807 = vpop.f32.mrf.mxu0
      %v808 = vadd.f32 0.0, %v807
      %v809 = vpop.f32.mrf.mxu0
      %v810 = vadd.f32 0.0, %v809
      %v811 = vpop.f32.mrf.mxu0
      %v812 = vadd.f32 0.0, %v811
      %v813 = vpop.f32.mrf.mxu0
      %v814 = vadd.f32 0.0, %v813
      %815 = vmatprep.mubr.bf16.mxu0 0
      %816 = vmatmul.mubr.bf16.gmra.mxu0 %v555
      %v817 = vpop.f32.mrf.mxu0
      %v818 = vadd.f32 0.0, %v817
      %v819 = vpop.f32.mrf.mxu0
      %v820 = vadd.f32 0.0, %v819
      %v821 = vpop.f32.mrf.mxu0
      %v822 = vadd.f32 0.0, %v821
      %v823 = vpop.f32.mrf.mxu0
      %v824 = vadd.f32 0.0, %v823
      %825 = vmatprep.mubr.bf16.mxu0 0
      %826 = vmatmul.mubr.bf16.gmra.mxu0 %v558
      %v827 = vpop.f32.mrf.mxu0
      %v828 = vadd.f32 0.0, %v827
      %v829 = vpop.f32.mrf.mxu0
      %v830 = vadd.f32 0.0, %v829
      %v831 = vpop.f32.mrf.mxu0
      %v832 = vadd.f32 0.0, %v831
      %v833 = vpop.f32.mrf.mxu0
      %v834 = vadd.f32 0.0, %v833
      %835 = vmatprep.mubr.bf16.mxu0 0
      %836 = vmatmul.mubr.bf16.gmra.mxu0 %v561
      %v837 = vpop.f32.mrf.mxu0
      %v838 = vadd.f32 0.0, %v837
      %v839 = vpop.f32.mrf.mxu0
      %v840 = vadd.f32 0.0, %v839
      %v841 = vpop.f32.mrf.mxu0
      %v842 = vadd.f32 0.0, %v841
      %v843 = vpop.f32.mrf.mxu0
      %v844 = vadd.f32 0.0, %v843
      %845 = vmatprep.mubr.bf16.mxu0 0
      %846 = vmatmul.mubr.bf16.gmra.mxu0 %v564
      %v847 = vpop.f32.mrf.mxu0
      %v848 = vadd.f32 0.0, %v847
      %v849 = vpop.f32.mrf.mxu0
      %v850 = vadd.f32 0.0, %v849
      %v851 = vpop.f32.mrf.mxu0
      %v852 = vadd.f32 0.0, %v851
      %v853 = vpop.f32.mrf.mxu0
      %v854 = vadd.f32 0.0, %v853
      %855 = vmatprep.mubr.bf16.mxu0 0
      %856 = vmatmul.mubr.bf16.gmra.mxu0 %v567
      %v857 = vpop.f32.mrf.mxu0
      %v858 = vadd.f32 0.0, %v857
      %v859 = vpop.f32.mrf.mxu0
      %v860 = vadd.f32 0.0, %v859
      %v861 = vpop.f32.mrf.mxu0
      %v862 = vadd.f32 0.0, %v861
      %v863 = vpop.f32.mrf.mxu0
      %v864 = vadd.f32 0.0, %v863
      %865 = vmatprep.mubr.bf16.mxu0 0
      %866 = vmatmul.mubr.bf16.gmra.mxu0 %v570
      %v867 = vpop.f32.mrf.mxu0
      %v868 = vadd.f32 0.0, %v867
      %v869 = vpop.f32.mrf.mxu0
      %v870 = vadd.f32 0.0, %v869
      %v871 = vpop.f32.mrf.mxu0
      %v872 = vadd.f32 0.0, %v871
      %v873 = vpop.f32.mrf.mxu0
      %v874 = vadd.f32 0.0, %v873
      %875 = vmatprep.mubr.bf16.mxu0 0
      %876 = vmatmul.mubr.bf16.gmra.mxu0 %v573
      %v877 = vpop.f32.mrf.mxu0
      %v878 = vadd.f32 0.0, %v877
      %v879 = vpop.f32.mrf.mxu0
      %v880 = vadd.f32 0.0, %v879
      %v881 = vpop.f32.mrf.mxu0
      %v882 = vadd.f32 0.0, %v881
      %v883 = vpop.f32.mrf.mxu0
      %v884 = vadd.f32 0.0, %v883
      %885 = vmatprep.mubr.bf16.mxu0 0
      %886 = vmatmul.mubr.bf16.gmra.mxu0 %v576
      %v887 = vpop.f32.mrf.mxu0
      %v888 = vadd.f32 0.0, %v887
      %v889 = vpop.f32.mrf.mxu0
      %v890 = vadd.f32 0.0, %v889
      %v891 = vpop.f32.mrf.mxu0
      %v892 = vadd.f32 0.0, %v891
      %v893 = vpop.f32.mrf.mxu0
      %v894 = vadd.f32 0.0, %v893
      %895 = vmatprep.mubr.bf16.mxu0 0
      %896 = vmatmul.mubr.bf16.gmra.mxu0 %v579
      %v897 = vpop.f32.mrf.mxu0
      %v898 = vadd.f32 0.0, %v897
      %v899 = vpop.f32.mrf.mxu0
      %v900 = vadd.f32 0.0, %v899
      %v901 = vpop.f32.mrf.mxu0
      %v902 = vadd.f32 0.0, %v901
      %v903 = vpop.f32.mrf.mxu0
      %v904 = vadd.f32 0.0, %v903
      %905 = vmatprep.mubr.bf16.mxu0 0
      %906 = vmatmul.mubr.bf16.gmra.mxu0 %v582
      %v907 = vpop.f32.mrf.mxu0
      %v908 = vadd.f32 0.0, %v907
      %v909 = vpop.f32.mrf.mxu0
      %v910 = vadd.f32 0.0, %v909
      %v911 = vpop.f32.mrf.mxu0
      %v912 = vadd.f32 0.0, %v911
      %v913 = vpop.f32.mrf.mxu0
      %v914 = vadd.f32 0.0, %v913
      %915 = vmatprep.mubr.bf16.mxu0 0
      %916 = vmatmul.mubr.bf16.gmra.mxu0 %v585
      %v917 = vpop.f32.mrf.mxu0
      %v918 = vadd.f32 0.0, %v917
      %v919 = vpop.f32.mrf.mxu0
      %v920 = vadd.f32 0.0, %v919
      %v921 = vpop.f32.mrf.mxu0
      %v922 = vadd.f32 0.0, %v921
      %v923 = vpop.f32.mrf.mxu0
      %v924 = vadd.f32 0.0, %v923
      %925 = vmatprep.mubr.bf16.mxu0 0
      %926 = vmatmul.mubr.bf16.gmra.mxu0 %v588
      %v927 = vpop.f32.mrf.mxu0
      %v928 = vadd.f32 0.0, %v927
      %v929 = vpop.f32.mrf.mxu0
      %v930 = vadd.f32 0.0, %v929
      %v931 = vpop.f32.mrf.mxu0
      %v932 = vadd.f32 0.0, %v931
      %v933 = vpop.f32.mrf.mxu0
      %v934 = vadd.f32 0.0, %v933
      %935 = vmatprep.mubr.bf16.mxu0 0
      %936 = vmatmul.mubr.bf16.gmra.mxu0 %v591
      %v937 = vpop.f32.mrf.mxu0
      %v938 = vadd.f32 0.0, %v937
      %v939 = vpop.f32.mrf.mxu0
      %v940 = vadd.f32 0.0, %v939
      %v941 = vpop.f32.mrf.mxu0
      %v942 = vadd.f32 0.0, %v941
      %v943 = vpop.f32.mrf.mxu0
      %v944 = vadd.f32 0.0, %v943
      %945 = vdwg.mxu0
      %v946 = vld [vmem:[%s2] sm:$0xff]
      %v947 = vld [vmem:[%s2 + $0x8] sm:$0xff]
      %v948 = vld [vmem:[%s2 + $0x10] sm:$0xff]
      %v949 = vld [vmem:[%s2 + $0x18] sm:$0xff]
      %v950 = vld [vmem:[%s2 + $0x20] sm:$0xff]
      %v951 = vld [vmem:[%s2 + $0x28] sm:$0xff]
      %v952 = vld [vmem:[%s2 + $0x30] sm:$0xff]
      %v953 = vld [vmem:[%s2 + $0x38] sm:$0xff]
      %v962 = vunpack.c.l.b16 %v946
      %v963 = vunpack.c.h.b16 %v946
      %v964 = vunpack.c.l.b16 %v947
      %v965 = vunpack.c.h.b16 %v947
      %v966 = vunpack.c.l.b16 %v948
      %v967 = vunpack.c.h.b16 %v948
      %v968 = vunpack.c.l.b16 %v949
      %v969 = vunpack.c.h.b16 %v949
      %v970 = vunpack.c.l.b16 %v950
      %v971 = vunpack.c.h.b16 %v950
      %v972 = vunpack.c.l.b16 %v951
      %v973 = vunpack.c.h.b16 %v951
      %v974 = vunpack.c.l.b16 %v952
      %v975 = vunpack.c.h.b16 %v952
      %v976 = vunpack.c.l.b16 %v953
      %v977 = vunpack.c.h.b16 %v953
      %v978 = vpack.c.b16 %v964, %v962
      %v979 = vpack.c.b16 %v965, %v963
      %v980 = vpack.c.b16 %v968, %v966
      %v981 = vpack.c.b16 %v969, %v967
      %v982 = vpack.c.b16 %v972, %v970
      %v983 = vpack.c.b16 %v973, %v971
      %v984 = vpack.c.b16 %v976, %v974
      %v985 = vpack.c.b16 %v977, %v975
      %v995 = vsel %vm496, %v320, 0
      %v998 = vsel %vm496, %v321, 0
      %v1001 = vsel %vm496, %v322, 0
      %v1004 = vsel %vm496, %v323, 0
      %v1007 = vsel %vm496, %v324, 0
      %v1010 = vsel %vm496, %v325, 0
      %v1013 = vsel %vm496, %v326, 0
      %v1016 = vsel %vm496, %v327, 0
      %v1019 = vsel %vm496, %v328, 0
      %v1022 = vsel %vm496, %v329, 0
      %v1025 = vsel %vm496, %v330, 0
      %v1028 = vsel %vm496, %v331, 0
      %v1031 = vsel %vm496, %v332, 0
      %v1034 = vsel %vm496, %v333, 0
      %v1037 = vsel %vm496, %v334, 0
      %v1040 = vsel %vm496, %v335, 0
      %v1043 = vsel %vm496, %v336, 0
      %v1046 = vsel %vm496, %v337, 0
      %v1049 = vsel %vm496, %v338, 0
      %v1052 = vsel %vm496, %v339, 0
      %v1055 = vsel %vm496, %v340, 0
      %v1058 = vsel %vm496, %v341, 0
      %v1061 = vsel %vm496, %v342, 0
      %v1064 = vsel %vm496, %v343, 0
      %v1067 = vsel %vm496, %v344, 0
      %v1070 = vsel %vm496, %v345, 0
      %v1073 = vsel %vm496, %v346, 0
      %v1076 = vsel %vm496, %v347, 0
      %v1079 = vsel %vm496, %v348, 0
      %v1082 = vsel %vm496, %v349, 0
      %v1085 = vsel %vm496, %v350, 0
      %v1088 = vsel %vm496, %v351, 0
      %1090 = vmatprep.subr.bf16.mxu0 0
      %1091 = vmatpush1.bf16.msra.mxu0 0
      %1092 = vmatprep.subr.bf16.mxu0 0
      %1093 = vmatpush1.bf16.msra.mxu0 0
      %1094 = vmatprep.subr.bf16.mxu0 0
      %1095 = vmatpush1.bf16.msra.mxu0 0
      %1096 = vmatprep.subr.bf16.mxu0 0
      %1097 = vmatpush1.bf16.msra.mxu0 0
      %1098 = vmatprep.subr.bf16.mxu0 %v985
      %1099 = vmatpush1.bf16.msra.mxu0 %v984
      %1100 = vmatprep.subr.bf16.mxu0 %v983
      %1101 = vmatpush1.bf16.msra.mxu0 %v982
      %1102 = vmatprep.subr.bf16.mxu0 %v981
      %1103 = vmatpush1.bf16.msra.mxu0 %v980
      %1104 = vmatprep.subr.bf16.mxu0 %v979
      %1105 = vmatpush1.bf16.msra.mxu0 %v978
      %1106 = vmatprep.subr.bf16.mxu0 0
      %1107 = vmatpush2.bf16.msra.mxu0 0
      %1108 = vmatprep.subr.bf16.mxu0 0
      %1109 = vmatpush2.bf16.msra.mxu0 0
      %1110 = vmatprep.subr.bf16.mxu0 0
      %1111 = vmatpush2.bf16.msra.mxu0 0
      %1112 = vmatprep.subr.bf16.mxu0 0
      %1113 = vmatpush2.bf16.msra.mxu0 0
      %1114 = vmatprep.subr.bf16.mxu0 0
      %1115 = vmatpush2.bf16.msra.mxu0 0
      %1116 = vmatprep.subr.bf16.mxu0 0
      %1117 = vmatpush2.bf16.msra.mxu0 0
      %1118 = vmatprep.subr.bf16.mxu0 0
      %1119 = vmatpush2.bf16.msra.mxu0 0
      %1120 = vmatprep.subr.bf16.mxu0 0
      %1121 = vmatpush2.bf16.msra.mxu0 0
      %1122 = vmatprep.mubr.bf16.mxu0 0
      %1123 = vmatmul.mubr.bf16.gmra.mxu0 %v995
      %v1124 = vpop.f32.mrf.mxu0
      %v1125 = vadd.f32 0.0, %v1124
      %v1126 = vpop.f32.mrf.mxu0
      %v1127 = vadd.f32 0.0, %v1126
      %v1128 = vpop.f32.mrf.mxu0
      %v1129 = vadd.f32 0.0, %v1128
      %v1130 = vpop.f32.mrf.mxu0
      %v1131 = vadd.f32 0.0, %v1130
      %1132 = vmatprep.mubr.bf16.mxu0 0
      %1133 = vmatmul.mubr.bf16.gmra.mxu0 %v998
      %v1134 = vpop.f32.mrf.mxu0
      %v1135 = vadd.f32 0.0, %v1134
      %v1136 = vpop.f32.mrf.mxu0
      %v1137 = vadd.f32 0.0, %v1136
      %v1138 = vpop.f32.mrf.mxu0
      %v1139 = vadd.f32 0.0, %v1138
      %v1140 = vpop.f32.mrf.mxu0
      %v1141 = vadd.f32 0.0, %v1140
      %1142 = vmatprep.mubr.bf16.mxu0 0
      %1143 = vmatmul.mubr.bf16.gmra.mxu0 %v1001
      %v1144 = vpop.f32.mrf.mxu0
      %v1145 = vadd.f32 0.0, %v1144
      %v1146 = vpop.f32.mrf.mxu0
      %v1147 = vadd.f32 0.0, %v1146
      %v1148 = vpop.f32.mrf.mxu0
      %v1149 = vadd.f32 0.0, %v1148
      %v1150 = vpop.f32.mrf.mxu0
      %v1151 = vadd.f32 0.0, %v1150
      %1152 = vmatprep.mubr.bf16.mxu0 0
      %1153 = vmatmul.mubr.bf16.gmra.mxu0 %v1004
      %v1154 = vpop.f32.mrf.mxu0
      %v1155 = vadd.f32 0.0, %v1154
      %v1156 = vpop.f32.mrf.mxu0
      %v1157 = vadd.f32 0.0, %v1156
      %v1158 = vpop.f32.mrf.mxu0
      %v1159 = vadd.f32 0.0, %v1158
      %v1160 = vpop.f32.mrf.mxu0
      %v1161 = vadd.f32 0.0, %v1160
      %1162 = vmatprep.mubr.bf16.mxu0 0
      %1163 = vmatmul.mubr.bf16.gmra.mxu0 %v1007
      %v1164 = vpop.f32.mrf.mxu0
      %v1165 = vadd.f32 0.0, %v1164
      %v1166 = vpop.f32.mrf.mxu0
      %v1167 = vadd.f32 0.0, %v1166
      %v1168 = vpop.f32.mrf.mxu0
      %v1169 = vadd.f32 0.0, %v1168
      %v1170 = vpop.f32.mrf.mxu0
      %v1171 = vadd.f32 0.0, %v1170
      %1172 = vmatprep.mubr.bf16.mxu0 0
      %1173 = vmatmul.mubr.bf16.gmra.mxu0 %v1010
      %v1174 = vpop.f32.mrf.mxu0
      %v1175 = vadd.f32 0.0, %v1174
      %v1176 = vpop.f32.mrf.mxu0
      %v1177 = vadd.f32 0.0, %v1176
      %v1178 = vpop.f32.mrf.mxu0
      %v1179 = vadd.f32 0.0, %v1178
      %v1180 = vpop.f32.mrf.mxu0
      %v1181 = vadd.f32 0.0, %v1180
      %1182 = vmatprep.mubr.bf16.mxu0 0
      %1183 = vmatmul.mubr.bf16.gmra.mxu0 %v1013
      %v1184 = vpop.f32.mrf.mxu0
      %v1185 = vadd.f32 0.0, %v1184
      %v1186 = vpop.f32.mrf.mxu0
      %v1187 = vadd.f32 0.0, %v1186
      %v1188 = vpop.f32.mrf.mxu0
      %v1189 = vadd.f32 0.0, %v1188
      %v1190 = vpop.f32.mrf.mxu0
      %v1191 = vadd.f32 0.0, %v1190
      %1192 = vmatprep.mubr.bf16.mxu0 0
      %1193 = vmatmul.mubr.bf16.gmra.mxu0 %v1016
      %v1194 = vpop.f32.mrf.mxu0
      %v1195 = vadd.f32 0.0, %v1194
      %v1196 = vpop.f32.mrf.mxu0
      %v1197 = vadd.f32 0.0, %v1196
      %v1198 = vpop.f32.mrf.mxu0
      %v1199 = vadd.f32 0.0, %v1198
      %v1200 = vpop.f32.mrf.mxu0
      %v1201 = vadd.f32 0.0, %v1200
      %1202 = vmatprep.mubr.bf16.mxu0 0
      %1203 = vmatmul.mubr.bf16.gmra.mxu0 %v1019
      %v1204 = vpop.f32.mrf.mxu0
      %v1205 = vadd.f32 0.0, %v1204
      %v1206 = vpop.f32.mrf.mxu0
      %v1207 = vadd.f32 0.0, %v1206
      %v1208 = vpop.f32.mrf.mxu0
      %v1209 = vadd.f32 0.0, %v1208
      %v1210 = vpop.f32.mrf.mxu0
      %v1211 = vadd.f32 0.0, %v1210
      %1212 = vmatprep.mubr.bf16.mxu0 0
      %1213 = vmatmul.mubr.bf16.gmra.mxu0 %v1022
      %v1214 = vpop.f32.mrf.mxu0
      %v1215 = vadd.f32 0.0, %v1214
      %v1216 = vpop.f32.mrf.mxu0
      %v1217 = vadd.f32 0.0, %v1216
      %v1218 = vpop.f32.mrf.mxu0
      %v1219 = vadd.f32 0.0, %v1218
      %v1220 = vpop.f32.mrf.mxu0
      %v1221 = vadd.f32 0.0, %v1220
      %1222 = vmatprep.mubr.bf16.mxu0 0
      %1223 = vmatmul.mubr.bf16.gmra.mxu0 %v1025
      %v1224 = vpop.f32.mrf.mxu0
      %v1225 = vadd.f32 0.0, %v1224
      %v1226 = vpop.f32.mrf.mxu0
      %v1227 = vadd.f32 0.0, %v1226
      %v1228 = vpop.f32.mrf.mxu0
      %v1229 = vadd.f32 0.0, %v1228
      %v1230 = vpop.f32.mrf.mxu0
      %v1231 = vadd.f32 0.0, %v1230
      %1232 = vmatprep.mubr.bf16.mxu0 0
      %1233 = vmatmul.mubr.bf16.gmra.mxu0 %v1028
      %v1234 = vpop.f32.mrf.mxu0
      %v1235 = vadd.f32 0.0, %v1234
      %v1236 = vpop.f32.mrf.mxu0
      %v1237 = vadd.f32 0.0, %v1236
      %v1238 = vpop.f32.mrf.mxu0
      %v1239 = vadd.f32 0.0, %v1238
      %v1240 = vpop.f32.mrf.mxu0
      %v1241 = vadd.f32 0.0, %v1240
      %1242 = vmatprep.mubr.bf16.mxu0 0
      %1243 = vmatmul.mubr.bf16.gmra.mxu0 %v1031
      %v1244 = vpop.f32.mrf.mxu0
      %v1245 = vadd.f32 0.0, %v1244
      %v1246 = vpop.f32.mrf.mxu0
      %v1247 = vadd.f32 0.0, %v1246
      %v1248 = vpop.f32.mrf.mxu0
      %v1249 = vadd.f32 0.0, %v1248
      %v1250 = vpop.f32.mrf.mxu0
      %v1251 = vadd.f32 0.0, %v1250
      %1252 = vmatprep.mubr.bf16.mxu0 0
      %1253 = vmatmul.mubr.bf16.gmra.mxu0 %v1034
      %v1254 = vpop.f32.mrf.mxu0
      %v1255 = vadd.f32 0.0, %v1254
      %v1256 = vpop.f32.mrf.mxu0
      %v1257 = vadd.f32 0.0, %v1256
      %v1258 = vpop.f32.mrf.mxu0
      %v1259 = vadd.f32 0.0, %v1258
      %v1260 = vpop.f32.mrf.mxu0
      %v1261 = vadd.f32 0.0, %v1260
      %1262 = vmatprep.mubr.bf16.mxu0 0
      %1263 = vmatmul.mubr.bf16.gmra.mxu0 %v1037
      %v1264 = vpop.f32.mrf.mxu0
      %v1265 = vadd.f32 0.0, %v1264
      %v1266 = vpop.f32.mrf.mxu0
      %v1267 = vadd.f32 0.0, %v1266
      %v1268 = vpop.f32.mrf.mxu0
      %v1269 = vadd.f32 0.0, %v1268
      %v1270 = vpop.f32.mrf.mxu0
      %v1271 = vadd.f32 0.0, %v1270
      %1272 = vmatprep.mubr.bf16.mxu0 0
      %1273 = vmatmul.mubr.bf16.gmra.mxu0 %v1040
      %v1274 = vpop.f32.mrf.mxu0
      %v1275 = vadd.f32 0.0, %v1274
      %v1276 = vpop.f32.mrf.mxu0
      %v1277 = vadd.f32 0.0, %v1276
      %v1278 = vpop.f32.mrf.mxu0
      %v1279 = vadd.f32 0.0, %v1278
      %v1280 = vpop.f32.mrf.mxu0
      %v1281 = vadd.f32 0.0, %v1280
      %1282 = vmatprep.mubr.bf16.mxu0 0
      %1283 = vmatmul.mubr.bf16.gmra.mxu0 %v1043
      %v1284 = vpop.f32.mrf.mxu0
      %v1285 = vadd.f32 0.0, %v1284
      %v1286 = vpop.f32.mrf.mxu0
      %v1287 = vadd.f32 0.0, %v1286
      %v1288 = vpop.f32.mrf.mxu0
      %v1289 = vadd.f32 0.0, %v1288
      %v1290 = vpop.f32.mrf.mxu0
      %v1291 = vadd.f32 0.0, %v1290
      %1292 = vmatprep.mubr.bf16.mxu0 0
      %1293 = vmatmul.mubr.bf16.gmra.mxu0 %v1046
      %v1294 = vpop.f32.mrf.mxu0
      %v1295 = vadd.f32 0.0, %v1294
      %v1296 = vpop.f32.mrf.mxu0
      %v1297 = vadd.f32 0.0, %v1296
      %v1298 = vpop.f32.mrf.mxu0
      %v1299 = vadd.f32 0.0, %v1298
      %v1300 = vpop.f32.mrf.mxu0
      %v1301 = vadd.f32 0.0, %v1300
      %1302 = vmatprep.mubr.bf16.mxu0 0
      %1303 = vmatmul.mubr.bf16.gmra.mxu0 %v1049
      %v1304 = vpop.f32.mrf.mxu0
      %v1305 = vadd.f32 0.0, %v1304
      %v1306 = vpop.f32.mrf.mxu0
      %v1307 = vadd.f32 0.0, %v1306
      %v1308 = vpop.f32.mrf.mxu0
      %v1309 = vadd.f32 0.0, %v1308
      %v1310 = vpop.f32.mrf.mxu0
      %v1311 = vadd.f32 0.0, %v1310
      %1312 = vmatprep.mubr.bf16.mxu0 0
      %1313 = vmatmul.mubr.bf16.gmra.mxu0 %v1052
      %v1314 = vpop.f32.mrf.mxu0
      %v1315 = vadd.f32 0.0, %v1314
      %v1316 = vpop.f32.mrf.mxu0
      %v1317 = vadd.f32 0.0, %v1316
      %v1318 = vpop.f32.mrf.mxu0
      %v1319 = vadd.f32 0.0, %v1318
      %v1320 = vpop.f32.mrf.mxu0
      %v1321 = vadd.f32 0.0, %v1320
      %1322 = vmatprep.mubr.bf16.mxu0 0
      %1323 = vmatmul.mubr.bf16.gmra.mxu0 %v1055
      %v1324 = vpop.f32.mrf.mxu0
      %v1325 = vadd.f32 0.0, %v1324
      %v1326 = vpop.f32.mrf.mxu0
      %v1327 = vadd.f32 0.0, %v1326
      %v1328 = vpop.f32.mrf.mxu0
      %v1329 = vadd.f32 0.0, %v1328
      %v1330 = vpop.f32.mrf.mxu0
      %v1331 = vadd.f32 0.0, %v1330
      %1332 = vmatprep.mubr.bf16.mxu0 0
      %1333 = vmatmul.mubr.bf16.gmra.mxu0 %v1058
      %v1334 = vpop.f32.mrf.mxu0
      %v1335 = vadd.f32 0.0, %v1334
      %v1336 = vpop.f32.mrf.mxu0
      %v1337 = vadd.f32 0.0, %v1336
      %v1338 = vpop.f32.mrf.mxu0
      %v1339 = vadd.f32 0.0, %v1338
      %v1340 = vpop.f32.mrf.mxu0
      %v1341 = vadd.f32 0.0, %v1340
      %1342 = vmatprep.mubr.bf16.mxu0 0
      %1343 = vmatmul.mubr.bf16.gmra.mxu0 %v1061
      %v1344 = vpop.f32.mrf.mxu0
      %v1345 = vadd.f32 0.0, %v1344
      %v1346 = vpop.f32.mrf.mxu0
      %v1347 = vadd.f32 0.0, %v1346
      %v1348 = vpop.f32.mrf.mxu0
      %v1349 = vadd.f32 0.0, %v1348
      %v1350 = vpop.f32.mrf.mxu0
      %v1351 = vadd.f32 0.0, %v1350
      %1352 = vmatprep.mubr.bf16.mxu0 0
      %1353 = vmatmul.mubr.bf16.gmra.mxu0 %v1064
      %v1354 = vpop.f32.mrf.mxu0
      %v1355 = vadd.f32 0.0, %v1354
      %v1356 = vpop.f32.mrf.mxu0
      %v1357 = vadd.f32 0.0, %v1356
      %v1358 = vpop.f32.mrf.mxu0
      %v1359 = vadd.f32 0.0, %v1358
      %v1360 = vpop.f32.mrf.mxu0
      %v1361 = vadd.f32 0.0, %v1360
      %1362 = vmatprep.mubr.bf16.mxu0 0
      %1363 = vmatmul.mubr.bf16.gmra.mxu0 %v1067
      %v1364 = vpop.f32.mrf.mxu0
      %v1365 = vadd.f32 0.0, %v1364
      %v1366 = vpop.f32.mrf.mxu0
      %v1367 = vadd.f32 0.0, %v1366
      %v1368 = vpop.f32.mrf.mxu0
      %v1369 = vadd.f32 0.0, %v1368
      %v1370 = vpop.f32.mrf.mxu0
      %v1371 = vadd.f32 0.0, %v1370
      %1372 = vmatprep.mubr.bf16.mxu0 0
      %1373 = vmatmul.mubr.bf16.gmra.mxu0 %v1070
      %v1374 = vpop.f32.mrf.mxu0
      %v1375 = vadd.f32 0.0, %v1374
      %v1376 = vpop.f32.mrf.mxu0
      %v1377 = vadd.f32 0.0, %v1376
      %v1378 = vpop.f32.mrf.mxu0
      %v1379 = vadd.f32 0.0, %v1378
      %v1380 = vpop.f32.mrf.mxu0
      %v1381 = vadd.f32 0.0, %v1380
      %1382 = vmatprep.mubr.bf16.mxu0 0
      %1383 = vmatmul.mubr.bf16.gmra.mxu0 %v1073
      %v1384 = vpop.f32.mrf.mxu0
      %v1385 = vadd.f32 0.0, %v1384
      %v1386 = vpop.f32.mrf.mxu0
      %v1387 = vadd.f32 0.0, %v1386
      %v1388 = vpop.f32.mrf.mxu0
      %v1389 = vadd.f32 0.0, %v1388
      %v1390 = vpop.f32.mrf.mxu0
      %v1391 = vadd.f32 0.0, %v1390
      %1392 = vmatprep.mubr.bf16.mxu0 0
      %1393 = vmatmul.mubr.bf16.gmra.mxu0 %v1076
      %v1394 = vpop.f32.mrf.mxu0
      %v1395 = vadd.f32 0.0, %v1394
      %v1396 = vpop.f32.mrf.mxu0
      %v1397 = vadd.f32 0.0, %v1396
      %v1398 = vpop.f32.mrf.mxu0
      %v1399 = vadd.f32 0.0, %v1398
      %v1400 = vpop.f32.mrf.mxu0
      %v1401 = vadd.f32 0.0, %v1400
      %1402 = vmatprep.mubr.bf16.mxu0 0
      %1403 = vmatmul.mubr.bf16.gmra.mxu0 %v1079
      %v1404 = vpop.f32.mrf.mxu0
      %v1405 = vadd.f32 0.0, %v1404
      %v1406 = vpop.f32.mrf.mxu0
      %v1407 = vadd.f32 0.0, %v1406
      %v1408 = vpop.f32.mrf.mxu0
      %v1409 = vadd.f32 0.0, %v1408
      %v1410 = vpop.f32.mrf.mxu0
      %v1411 = vadd.f32 0.0, %v1410
      %1412 = vmatprep.mubr.bf16.mxu0 0
      %1413 = vmatmul.mubr.bf16.gmra.mxu0 %v1082
      %v1414 = vpop.f32.mrf.mxu0
      %v1415 = vadd.f32 0.0, %v1414
      %v1416 = vpop.f32.mrf.mxu0
      %v1417 = vadd.f32 0.0, %v1416
      %v1418 = vpop.f32.mrf.mxu0
      %v1419 = vadd.f32 0.0, %v1418
      %v1420 = vpop.f32.mrf.mxu0
      %v1421 = vadd.f32 0.0, %v1420
      %1422 = vmatprep.mubr.bf16.mxu0 0
      %1423 = vmatmul.mubr.bf16.gmra.mxu0 %v1085
      %v1424 = vpop.f32.mrf.mxu0
      %v1425 = vadd.f32 0.0, %v1424
      %v1426 = vpop.f32.mrf.mxu0
      %v1427 = vadd.f32 0.0, %v1426
      %v1428 = vpop.f32.mrf.mxu0
      %v1429 = vadd.f32 0.0, %v1428
      %v1430 = vpop.f32.mrf.mxu0
      %v1431 = vadd.f32 0.0, %v1430
      %1432 = vmatprep.mubr.bf16.mxu0 0
      %1433 = vmatmul.mubr.bf16.gmra.mxu0 %v1088
      %v1434 = vpop.f32.mrf.mxu0
      %v1435 = vadd.f32 0.0, %v1434
      %v1436 = vpop.f32.mrf.mxu0
      %v1437 = vadd.f32 0.0, %v1436
      %v1438 = vpop.f32.mrf.mxu0
      %v1439 = vadd.f32 0.0, %v1438
      %v1440 = vpop.f32.mrf.mxu0
      %v1441 = vadd.f32 0.0, %v1440
      %1442 = vdwg.mxu0
      %v1443 = vadd.f32 %v628, %v1125
      %v1444 = vadd.f32 %v632, %v1129
      %v1445 = vadd.f32 %v638, %v1135
      %v1446 = vadd.f32 %v642, %v1139
      %v1447 = vadd.f32 %v648, %v1145
      %v1448 = vadd.f32 %v652, %v1149
      %v1449 = vadd.f32 %v658, %v1155
      %v1450 = vadd.f32 %v662, %v1159
      %v1451 = vadd.f32 %v668, %v1165
      %v1452 = vadd.f32 %v672, %v1169
      %v1453 = vadd.f32 %v678, %v1175
      %v1454 = vadd.f32 %v682, %v1179
      %v1455 = vadd.f32 %v688, %v1185
      %v1456 = vadd.f32 %v692, %v1189
      %v1457 = vadd.f32 %v698, %v1195
      %v1458 = vadd.f32 %v702, %v1199
      %v1459 = vadd.f32 %v708, %v1205
      %v1460 = vadd.f32 %v712, %v1209
      %v1461 = vadd.f32 %v718, %v1215
      %v1462 = vadd.f32 %v722, %v1219
      %v1463 = vadd.f32 %v728, %v1225
      %v1464 = vadd.f32 %v732, %v1229
      %v1465 = vadd.f32 %v738, %v1235
      %v1466 = vadd.f32 %v742, %v1239
      %v1467 = vadd.f32 %v748, %v1245
      %v1468 = vadd.f32 %v752, %v1249
      %v1469 = vadd.f32 %v758, %v1255
      %v1470 = vadd.f32 %v762, %v1259
      %v1471 = vadd.f32 %v768, %v1265
      %v1472 = vadd.f32 %v772, %v1269
      %v1473 = vadd.f32 %v778, %v1275
      %v1474 = vadd.f32 %v782, %v1279
      %v1475 = vadd.f32 %v788, %v1285
      %v1476 = vadd.f32 %v792, %v1289
      %v1477 = vadd.f32 %v798, %v1295
      %v1478 = vadd.f32 %v802, %v1299
      %v1479 = vadd.f32 %v808, %v1305
      %v1480 = vadd.f32 %v812, %v1309
      %v1481 = vadd.f32 %v818, %v1315
      %v1482 = vadd.f32 %v822, %v1319
      %v1483 = vadd.f32 %v828, %v1325
      %v1484 = vadd.f32 %v832, %v1329
      %v1485 = vadd.f32 %v838, %v1335
      %v1486 = vadd.f32 %v842, %v1339
      %v1487 = vadd.f32 %v848, %v1345
      %v1488 = vadd.f32 %v852, %v1349
      %v1489 = vadd.f32 %v858, %v1355
      %v1490 = vadd.f32 %v862, %v1359
      %v1491 = vadd.f32 %v868, %v1365
      %v1492 = vadd.f32 %v872, %v1369
      %v1493 = vadd.f32 %v878, %v1375
      %v1494 = vadd.f32 %v882, %v1379
      %v1495 = vadd.f32 %v888, %v1385
      %v1496 = vadd.f32 %v892, %v1389
      %v1497 = vadd.f32 %v898, %v1395
      %v1498 = vadd.f32 %v902, %v1399
      %v1499 = vadd.f32 %v908, %v1405
      %v1500 = vadd.f32 %v912, %v1409
      %v1501 = vadd.f32 %v918, %v1415
      %v1502 = vadd.f32 %v922, %v1419
      %v1503 = vadd.f32 %v928, %v1425
      %v1504 = vadd.f32 %v932, %v1429
      %v1505 = vadd.f32 %v938, %v1435
      %v1506 = vadd.f32 %v942, %v1439
      %v1507 = vld [vmem:[%s4] sm:$0x1]
      %v1509 = vlaneseq
      %v1510 = vshrl.u32 %v1509, 7
      %v1511 = vsub.s32 0, %v1510
      %v1512 = vrot.slane %v1507, %v1511
      %v1514 = vadd.f32 %v1443, %v1512
      %v1515 = vadd.f32 %v1444, %v1512
      %v1516 = vadd.f32 %v1445, %v1512
      %v1517 = vadd.f32 %v1446, %v1512
      %v1518 = vadd.f32 %v1447, %v1512
      %v1519 = vadd.f32 %v1448, %v1512
      %v1520 = vadd.f32 %v1449, %v1512
      %v1521 = vadd.f32 %v1450, %v1512
      %v1522 = vadd.f32 %v1451, %v1512
      %v1523 = vadd.f32 %v1452, %v1512
      %v1524 = vadd.f32 %v1453, %v1512
      %v1525 = vadd.f32 %v1454, %v1512
      %v1526 = vadd.f32 %v1455, %v1512
      %v1527 = vadd.f32 %v1456, %v1512
      %v1528 = vadd.f32 %v1457, %v1512
      %v1529 = vadd.f32 %v1458, %v1512
      %v1530 = vadd.f32 %v1459, %v1512
      %v1531 = vadd.f32 %v1460, %v1512
      %v1532 = vadd.f32 %v1461, %v1512
      %v1533 = vadd.f32 %v1462, %v1512
      %v1534 = vadd.f32 %v1463, %v1512
      %v1535 = vadd.f32 %v1464, %v1512
      %v1536 = vadd.f32 %v1465, %v1512
      %v1537 = vadd.f32 %v1466, %v1512
      %v1538 = vadd.f32 %v1467, %v1512
      %v1539 = vadd.f32 %v1468, %v1512
      %v1540 = vadd.f32 %v1469, %v1512
      %v1541 = vadd.f32 %v1470, %v1512
      %v1542 = vadd.f32 %v1471, %v1512
      %v1543 = vadd.f32 %v1472, %v1512
      %v1544 = vadd.f32 %v1473, %v1512
      %v1545 = vadd.f32 %v1474, %v1512
      %v1546 = vadd.f32 %v1475, %v1512
      %v1547 = vadd.f32 %v1476, %v1512
      %v1548 = vadd.f32 %v1477, %v1512
      %v1549 = vadd.f32 %v1478, %v1512
      %v1550 = vadd.f32 %v1479, %v1512
      %v1551 = vadd.f32 %v1480, %v1512
      %v1552 = vadd.f32 %v1481, %v1512
      %v1553 = vadd.f32 %v1482, %v1512
      %v1554 = vadd.f32 %v1483, %v1512
      %v1555 = vadd.f32 %v1484, %v1512
      %v1556 = vadd.f32 %v1485, %v1512
      %v1557 = vadd.f32 %v1486, %v1512
      %v1558 = vadd.f32 %v1487, %v1512
      %v1559 = vadd.f32 %v1488, %v1512
      %v1560 = vadd.f32 %v1489, %v1512
      %v1561 = vadd.f32 %v1490, %v1512
      %v1562 = vadd.f32 %v1491, %v1512
      %v1563 = vadd.f32 %v1492, %v1512
      %v1564 = vadd.f32 %v1493, %v1512
      %v1565 = vadd.f32 %v1494, %v1512
      %v1566 = vadd.f32 %v1495, %v1512
      %v1567 = vadd.f32 %v1496, %v1512
      %v1568 = vadd.f32 %v1497, %v1512
      %v1569 = vadd.f32 %v1498, %v1512
      %v1570 = vadd.f32 %v1499, %v1512
      %v1571 = vadd.f32 %v1500, %v1512
      %v1572 = vadd.f32 %v1501, %v1512
      %v1573 = vadd.f32 %v1502, %v1512
      %v1574 = vadd.f32 %v1503, %v1512
      %v1575 = vadd.f32 %v1504, %v1512
      %v1576 = vadd.f32 %v1505, %v1512
      %v1577 = vadd.f32 %v1506, %v1512
      %v1578 = vpack.c.bf16 %v1515, %v1514
      %v1579 = vpack.c.bf16 %v1517, %v1516
      %v1580 = vpack.c.bf16 %v1519, %v1518
      %v1581 = vpack.c.bf16 %v1521, %v1520
      %v1582 = vpack.c.bf16 %v1523, %v1522
      %v1583 = vpack.c.bf16 %v1525, %v1524
      %v1584 = vpack.c.bf16 %v1527, %v1526
      %v1585 = vpack.c.bf16 %v1529, %v1528
      %v1586 = vpack.c.bf16 %v1531, %v1530
      %v1587 = vpack.c.bf16 %v1533, %v1532
      %v1588 = vpack.c.bf16 %v1535, %v1534
      %v1589 = vpack.c.bf16 %v1537, %v1536
      %v1590 = vpack.c.bf16 %v1539, %v1538
      %v1591 = vpack.c.bf16 %v1541, %v1540
      %v1592 = vpack.c.bf16 %v1543, %v1542
      %v1593 = vpack.c.bf16 %v1545, %v1544
      %v1594 = vpack.c.bf16 %v1547, %v1546
      %v1595 = vpack.c.bf16 %v1549, %v1548
      %v1596 = vpack.c.bf16 %v1551, %v1550
      %v1597 = vpack.c.bf16 %v1553, %v1552
      %v1598 = vpack.c.bf16 %v1555, %v1554
      %v1599 = vpack.c.bf16 %v1557, %v1556
      %v1600 = vpack.c.bf16 %v1559, %v1558
      %v1601 = vpack.c.bf16 %v1561, %v1560
      %v1602 = vpack.c.bf16 %v1563, %v1562
      %v1603 = vpack.c.bf16 %v1565, %v1564
      %v1604 = vpack.c.bf16 %v1567, %v1566
      %v1605 = vpack.c.bf16 %v1569, %v1568
      %v1606 = vpack.c.bf16 %v1571, %v1570
      %v1607 = vpack.c.bf16 %v1573, %v1572
      %v1608 = vpack.c.bf16 %v1575, %v1574
      %v1609 = vpack.c.bf16 %v1577, %v1576
      %v1610 = vld [vmem:[%s3] sm:$0xf]
      %v1611 = vld [vmem:[%s3 + $0x4] sm:$0xf]
      %v1612 = vld [vmem:[%s3 + $0x8] sm:$0xf]
      %v1613 = vld [vmem:[%s3 + $0xc] sm:$0xf]
      %v1614 = vld [vmem:[%s3 + $0x10] sm:$0xf]
      %v1615 = vld [vmem:[%s3 + $0x14] sm:$0xf]
      %v1616 = vld [vmem:[%s3 + $0x18] sm:$0xf]
      %v1617 = vld [vmem:[%s3 + $0x1c] sm:$0xf]
      %v1618 = vld [vmem:[%s3 + $0x20] sm:$0xf]
      %v1619 = vld [vmem:[%s3 + $0x24] sm:$0xf]
      %v1620 = vld [vmem:[%s3 + $0x28] sm:$0xf]
      %v1621 = vld [vmem:[%s3 + $0x2c] sm:$0xf]
      %v1622 = vld [vmem:[%s3 + $0x30] sm:$0xf]
      %v1623 = vld [vmem:[%s3 + $0x34] sm:$0xf]
      %v1624 = vld [vmem:[%s3 + $0x38] sm:$0xf]
      %v1625 = vld [vmem:[%s3 + $0x3c] sm:$0xf]
      %v1642 = vunpack.c.l.b16 %v1610
      %v1643 = vunpack.c.l.b16 %v1611
      %v1644 = vunpack.c.l.b16 %v1612
      %v1645 = vunpack.c.l.b16 %v1613
      %v1646 = vunpack.c.l.b16 %v1614
      %v1647 = vunpack.c.l.b16 %v1615
      %v1648 = vunpack.c.l.b16 %v1616
      %v1649 = vunpack.c.l.b16 %v1617
      %v1650 = vunpack.c.l.b16 %v1618
      %v1651 = vunpack.c.l.b16 %v1619
      %v1652 = vunpack.c.l.b16 %v1620
      %v1653 = vunpack.c.l.b16 %v1621
      %v1654 = vunpack.c.l.b16 %v1622
      %v1655 = vunpack.c.l.b16 %v1623
      %v1656 = vunpack.c.l.b16 %v1624
      %v1657 = vunpack.c.l.b16 %v1625
      %v1658 = vpack.c.b16 %v1643, %v1642
      %v1659 = vpack.c.b16 %v1645, %v1644
      %v1660 = vpack.c.b16 %v1647, %v1646
      %v1661 = vpack.c.b16 %v1649, %v1648
      %v1662 = vpack.c.b16 %v1651, %v1650
      %v1663 = vpack.c.b16 %v1653, %v1652
      %v1664 = vpack.c.b16 %v1655, %v1654
      %v1665 = vpack.c.b16 %v1657, %v1656
      %1674 = vmatprep.subr.bf16.mxu0 0
      %1675 = vmatpush1.bf16.msra.mxu0 %v1665
      %1676 = vmatprep.subr.bf16.mxu0 0
      %1677 = vmatpush1.bf16.msra.mxu0 %v1664
      %1678 = vmatprep.subr.bf16.mxu0 0
      %1679 = vmatpush1.bf16.msra.mxu0 %v1663
      %1680 = vmatprep.subr.bf16.mxu0 0
      %1681 = vmatpush1.bf16.msra.mxu0 %v1662
      %1682 = vmatprep.subr.bf16.mxu0 0
      %1683 = vmatpush1.bf16.msra.mxu0 %v1661
      %1684 = vmatprep.subr.bf16.mxu0 0
      %1685 = vmatpush1.bf16.msra.mxu0 %v1660
      %1686 = vmatprep.subr.bf16.mxu0 0
      %1687 = vmatpush1.bf16.msra.mxu0 %v1659
      %1688 = vmatprep.subr.bf16.mxu0 0
      %1689 = vmatpush1.bf16.msra.mxu0 %v1658
      %1690 = vmatprep.subr.bf16.mxu0 0
      %1691 = vmatpush2.bf16.msra.mxu0 0
      %1692 = vmatprep.subr.bf16.mxu0 0
      %1693 = vmatpush2.bf16.msra.mxu0 0
      %1694 = vmatprep.subr.bf16.mxu0 0
      %1695 = vmatpush2.bf16.msra.mxu0 0
      %1696 = vmatprep.subr.bf16.mxu0 0
      %1697 = vmatpush2.bf16.msra.mxu0 0
      %1698 = vmatprep.subr.bf16.mxu0 0
      %1699 = vmatpush2.bf16.msra.mxu0 0
      %1700 = vmatprep.subr.bf16.mxu0 0
      %1701 = vmatpush2.bf16.msra.mxu0 0
      %1702 = vmatprep.subr.bf16.mxu0 0
      %1703 = vmatpush2.bf16.msra.mxu0 0
      %1704 = vmatprep.subr.bf16.mxu0 0
      %1705 = vmatpush2.bf16.msra.mxu0 0
      %1706 = vmatprep.mubr.bf16.mxu0 0
      %1707 = vmatmul.mubr.bf16.gmra.mxu0 %v1578
      %v1708 = vpop.f32.mrf.mxu0
      %v1709 = vadd.f32 %v630, %v1708
      %v1710 = vpop.f32.mrf.mxu0
      %v1711 = vpop.f32.mrf.mxu0
      %v1712 = vadd.f32 %v634, %v1711
      %v1713 = vpop.f32.mrf.mxu0
      %1714 = vmatprep.mubr.bf16.mxu0 0
      %1715 = vmatmul.mubr.bf16.gmra.mxu0 %v1579
      %v1716 = vpop.f32.mrf.mxu0
      %v1717 = vadd.f32 %v640, %v1716
      %v1718 = vpop.f32.mrf.mxu0
      %v1719 = vpop.f32.mrf.mxu0
      %v1720 = vadd.f32 %v644, %v1719
      %v1721 = vpop.f32.mrf.mxu0
      %1722 = vmatprep.mubr.bf16.mxu0 0
      %1723 = vmatmul.mubr.bf16.gmra.mxu0 %v1580
      %v1724 = vpop.f32.mrf.mxu0
      %v1725 = vadd.f32 %v650, %v1724
      %v1726 = vpop.f32.mrf.mxu0
      %v1727 = vpop.f32.mrf.mxu0
      %v1728 = vadd.f32 %v654, %v1727
      %v1729 = vpop.f32.mrf.mxu0
      %1730 = vmatprep.mubr.bf16.mxu0 0
      %1731 = vmatmul.mubr.bf16.gmra.mxu0 %v1581
      %v1732 = vpop.f32.mrf.mxu0
      %v1733 = vadd.f32 %v660, %v1732
      %v1734 = vpop.f32.mrf.mxu0
      %v1735 = vpop.f32.mrf.mxu0
      %v1736 = vadd.f32 %v664, %v1735
      %v1737 = vpop.f32.mrf.mxu0
      %1738 = vmatprep.mubr.bf16.mxu0 0
      %1739 = vmatmul.mubr.bf16.gmra.mxu0 %v1582
      %v1740 = vpop.f32.mrf.mxu0
      %v1741 = vadd.f32 %v670, %v1740
      %v1742 = vpop.f32.mrf.mxu0
      %v1743 = vpop.f32.mrf.mxu0
      %v1744 = vadd.f32 %v674, %v1743
      %v1745 = vpop.f32.mrf.mxu0
      %1746 = vmatprep.mubr.bf16.mxu0 0
      %1747 = vmatmul.mubr.bf16.gmra.mxu0 %v1583
      %v1748 = vpop.f32.mrf.mxu0
      %v1749 = vadd.f32 %v680, %v1748
      %v1750 = vpop.f32.mrf.mxu0
      %v1751 = vpop.f32.mrf.mxu0
      %v1752 = vadd.f32 %v684, %v1751
      %v1753 = vpop.f32.mrf.mxu0
      %1754 = vmatprep.mubr.bf16.mxu0 0
      %1755 = vmatmul.mubr.bf16.gmra.mxu0 %v1584
      %v1756 = vpop.f32.mrf.mxu0
      %v1757 = vadd.f32 %v690, %v1756
      %v1758 = vpop.f32.mrf.mxu0
      %v1759 = vpop.f32.mrf.mxu0
      %v1760 = vadd.f32 %v694, %v1759
      %v1761 = vpop.f32.mrf.mxu0
      %1762 = vmatprep.mubr.bf16.mxu0 0
      %1763 = vmatmul.mubr.bf16.gmra.mxu0 %v1585
      %v1764 = vpop.f32.mrf.mxu0
      %v1765 = vadd.f32 %v700, %v1764
      %v1766 = vpop.f32.mrf.mxu0
      %v1767 = vpop.f32.mrf.mxu0
      %v1768 = vadd.f32 %v704, %v1767
      %v1769 = vpop.f32.mrf.mxu0
      %1770 = vmatprep.mubr.bf16.mxu0 0
      %1771 = vmatmul.mubr.bf16.gmra.mxu0 %v1586
      %v1772 = vpop.f32.mrf.mxu0
      %v1773 = vadd.f32 %v710, %v1772
      %v1774 = vpop.f32.mrf.mxu0
      %v1775 = vpop.f32.mrf.mxu0
      %v1776 = vadd.f32 %v714, %v1775
      %v1777 = vpop.f32.mrf.mxu0
      %1778 = vmatprep.mubr.bf16.mxu0 0
      %1779 = vmatmul.mubr.bf16.gmra.mxu0 %v1587
      %v1780 = vpop.f32.mrf.mxu0
      %v1781 = vadd.f32 %v720, %v1780
      %v1782 = vpop.f32.mrf.mxu0
      %v1783 = vpop.f32.mrf.mxu0
      %v1784 = vadd.f32 %v724, %v1783
      %v1785 = vpop.f32.mrf.mxu0
      %1786 = vmatprep.mubr.bf16.mxu0 0
      %1787 = vmatmul.mubr.bf16.gmra.mxu0 %v1588
      %v1788 = vpop.f32.mrf.mxu0
      %v1789 = vadd.f32 %v730, %v1788
      %v1790 = vpop.f32.mrf.mxu0
      %v1791 = vpop.f32.mrf.mxu0
      %v1792 = vadd.f32 %v734, %v1791
      %v1793 = vpop.f32.mrf.mxu0
      %1794 = vmatprep.mubr.bf16.mxu0 0
      %1795 = vmatmul.mubr.bf16.gmra.mxu0 %v1589
      %v1796 = vpop.f32.mrf.mxu0
      %v1797 = vadd.f32 %v740, %v1796
      %v1798 = vpop.f32.mrf.mxu0
      %v1799 = vpop.f32.mrf.mxu0
      %v1800 = vadd.f32 %v744, %v1799
      %v1801 = vpop.f32.mrf.mxu0
      %1802 = vmatprep.mubr.bf16.mxu0 0
      %1803 = vmatmul.mubr.bf16.gmra.mxu0 %v1590
      %v1804 = vpop.f32.mrf.mxu0
      %v1805 = vadd.f32 %v750, %v1804
      %v1806 = vpop.f32.mrf.mxu0
      %v1807 = vpop.f32.mrf.mxu0
      %v1808 = vadd.f32 %v754, %v1807
      %v1809 = vpop.f32.mrf.mxu0
      %1810 = vmatprep.mubr.bf16.mxu0 0
      %1811 = vmatmul.mubr.bf16.gmra.mxu0 %v1591
      %v1812 = vpop.f32.mrf.mxu0
      %v1813 = vadd.f32 %v760, %v1812
      %v1814 = vpop.f32.mrf.mxu0
      %v1815 = vpop.f32.mrf.mxu0
      %v1816 = vadd.f32 %v764, %v1815
      %v1817 = vpop.f32.mrf.mxu0
      %1818 = vmatprep.mubr.bf16.mxu0 0
      %1819 = vmatmul.mubr.bf16.gmra.mxu0 %v1592
      %v1820 = vpop.f32.mrf.mxu0
      %v1821 = vadd.f32 %v770, %v1820
      %v1822 = vpop.f32.mrf.mxu0
      %v1823 = vpop.f32.mrf.mxu0
      %v1824 = vadd.f32 %v774, %v1823
      %v1825 = vpop.f32.mrf.mxu0
      %1826 = vmatprep.mubr.bf16.mxu0 0
      %1827 = vmatmul.mubr.bf16.gmra.mxu0 %v1593
      %v1828 = vpop.f32.mrf.mxu0
      %v1829 = vadd.f32 %v780, %v1828
      %v1830 = vpop.f32.mrf.mxu0
      %v1831 = vpop.f32.mrf.mxu0
      %v1832 = vadd.f32 %v784, %v1831
      %v1833 = vpop.f32.mrf.mxu0
      %1834 = vmatprep.mubr.bf16.mxu0 0
      %1835 = vmatmul.mubr.bf16.gmra.mxu0 %v1594
      %v1836 = vpop.f32.mrf.mxu0
      %v1837 = vadd.f32 %v790, %v1836
      %v1838 = vpop.f32.mrf.mxu0
      %v1839 = vpop.f32.mrf.mxu0
      %v1840 = vadd.f32 %v794, %v1839
      %v1841 = vpop.f32.mrf.mxu0
      %1842 = vmatprep.mubr.bf16.mxu0 0
      %1843 = vmatmul.mubr.bf16.gmra.mxu0 %v1595
      %v1844 = vpop.f32.mrf.mxu0
      %v1845 = vadd.f32 %v800, %v1844
      %v1846 = vpop.f32.mrf.mxu0
      %v1847 = vpop.f32.mrf.mxu0
      %v1848 = vadd.f32 %v804, %v1847
      %v1849 = vpop.f32.mrf.mxu0
      %1850 = vmatprep.mubr.bf16.mxu0 0
      %1851 = vmatmul.mubr.bf16.gmra.mxu0 %v1596
      %v1852 = vpop.f32.mrf.mxu0
      %v1853 = vadd.f32 %v810, %v1852
      %v1854 = vpop.f32.mrf.mxu0
      %v1855 = vpop.f32.mrf.mxu0
      %v1856 = vadd.f32 %v814, %v1855
      %v1857 = vpop.f32.mrf.mxu0
      %1858 = vmatprep.mubr.bf16.mxu0 0
      %1859 = vmatmul.mubr.bf16.gmra.mxu0 %v1597
      %v1860 = vpop.f32.mrf.mxu0
      %v1861 = vadd.f32 %v820, %v1860
      %v1862 = vpop.f32.mrf.mxu0
      %v1863 = vpop.f32.mrf.mxu0
      %v1864 = vadd.f32 %v824, %v1863
      %v1865 = vpop.f32.mrf.mxu0
      %1866 = vmatprep.mubr.bf16.mxu0 0
      %1867 = vmatmul.mubr.bf16.gmra.mxu0 %v1598
      %v1868 = vpop.f32.mrf.mxu0
      %v1869 = vadd.f32 %v830, %v1868
      %v1870 = vpop.f32.mrf.mxu0
      %v1871 = vpop.f32.mrf.mxu0
      %v1872 = vadd.f32 %v834, %v1871
      %v1873 = vpop.f32.mrf.mxu0
      %1874 = vmatprep.mubr.bf16.mxu0 0
      %1875 = vmatmul.mubr.bf16.gmra.mxu0 %v1599
      %v1876 = vpop.f32.mrf.mxu0
      %v1877 = vadd.f32 %v840, %v1876
      %v1878 = vpop.f32.mrf.mxu0
      %v1879 = vpop.f32.mrf.mxu0
      %v1880 = vadd.f32 %v844, %v1879
      %v1881 = vpop.f32.mrf.mxu0
      %1882 = vmatprep.mubr.bf16.mxu0 0
      %1883 = vmatmul.mubr.bf16.gmra.mxu0 %v1600
      %v1884 = vpop.f32.mrf.mxu0
      %v1885 = vadd.f32 %v850, %v1884
      %v1886 = vpop.f32.mrf.mxu0
      %v1887 = vpop.f32.mrf.mxu0
      %v1888 = vadd.f32 %v854, %v1887
      %v1889 = vpop.f32.mrf.mxu0
      %1890 = vmatprep.mubr.bf16.mxu0 0
      %1891 = vmatmul.mubr.bf16.gmra.mxu0 %v1601
      %v1892 = vpop.f32.mrf.mxu0
      %v1893 = vadd.f32 %v860, %v1892
      %v1894 = vpop.f32.mrf.mxu0
      %v1895 = vpop.f32.mrf.mxu0
      %v1896 = vadd.f32 %v864, %v1895
      %v1897 = vpop.f32.mrf.mxu0
      %1898 = vmatprep.mubr.bf16.mxu0 0
      %1899 = vmatmul.mubr.bf16.gmra.mxu0 %v1602
      %v1900 = vpop.f32.mrf.mxu0
      %v1901 = vadd.f32 %v870, %v1900
      %v1902 = vpop.f32.mrf.mxu0
      %v1903 = vpop.f32.mrf.mxu0
      %v1904 = vadd.f32 %v874, %v1903
      %v1905 = vpop.f32.mrf.mxu0
      %1906 = vmatprep.mubr.bf16.mxu0 0
      %1907 = vmatmul.mubr.bf16.gmra.mxu0 %v1603
      %v1908 = vpop.f32.mrf.mxu0
      %v1909 = vadd.f32 %v880, %v1908
      %v1910 = vpop.f32.mrf.mxu0
      %v1911 = vpop.f32.mrf.mxu0
      %v1912 = vadd.f32 %v884, %v1911
      %v1913 = vpop.f32.mrf.mxu0
      %1914 = vmatprep.mubr.bf16.mxu0 0
      %1915 = vmatmul.mubr.bf16.gmra.mxu0 %v1604
      %v1916 = vpop.f32.mrf.mxu0
      %v1917 = vadd.f32 %v890, %v1916
      %v1918 = vpop.f32.mrf.mxu0
      %v1919 = vpop.f32.mrf.mxu0
      %v1920 = vadd.f32 %v894, %v1919
      %v1921 = vpop.f32.mrf.mxu0
      %1922 = vmatprep.mubr.bf16.mxu0 0
      %1923 = vmatmul.mubr.bf16.gmra.mxu0 %v1605
      %v1924 = vpop.f32.mrf.mxu0
      %v1925 = vadd.f32 %v900, %v1924
      %v1926 = vpop.f32.mrf.mxu0
      %v1927 = vpop.f32.mrf.mxu0
      %v1928 = vadd.f32 %v904, %v1927
      %v1929 = vpop.f32.mrf.mxu0
      %1930 = vmatprep.mubr.bf16.mxu0 0
      %1931 = vmatmul.mubr.bf16.gmra.mxu0 %v1606
      %v1932 = vpop.f32.mrf.mxu0
      %v1933 = vadd.f32 %v910, %v1932
      %v1934 = vpop.f32.mrf.mxu0
      %v1935 = vpop.f32.mrf.mxu0
      %v1936 = vadd.f32 %v914, %v1935
      %v1937 = vpop.f32.mrf.mxu0
      %1938 = vmatprep.mubr.bf16.mxu0 0
      %1939 = vmatmul.mubr.bf16.gmra.mxu0 %v1607
      %v1940 = vpop.f32.mrf.mxu0
      %v1941 = vadd.f32 %v920, %v1940
      %v1942 = vpop.f32.mrf.mxu0
      %v1943 = vpop.f32.mrf.mxu0
      %v1944 = vadd.f32 %v924, %v1943
      %v1945 = vpop.f32.mrf.mxu0
      %1946 = vmatprep.mubr.bf16.mxu0 0
      %1947 = vmatmul.mubr.bf16.gmra.mxu0 %v1608
      %v1948 = vpop.f32.mrf.mxu0
      %v1949 = vadd.f32 %v930, %v1948
      %v1950 = vpop.f32.mrf.mxu0
      %v1951 = vpop.f32.mrf.mxu0
      %v1952 = vadd.f32 %v934, %v1951
      %v1953 = vpop.f32.mrf.mxu0
      %1954 = vmatprep.mubr.bf16.mxu0 0
      %1955 = vmatmul.mubr.bf16.gmra.mxu0 %v1609
      %v1956 = vpop.f32.mrf.mxu0
      %v1957 = vadd.f32 %v940, %v1956
      %v1958 = vpop.f32.mrf.mxu0
      %v1959 = vpop.f32.mrf.mxu0
      %v1960 = vadd.f32 %v944, %v1959
      %v1961 = vpop.f32.mrf.mxu0
      %1962 = vdwg.mxu0
      %v1963 = vadd.f32 %v1709, %v1127
      %v1964 = vadd.f32 %v1712, %v1131
      %v1965 = vadd.f32 %v1717, %v1137
      %v1966 = vadd.f32 %v1720, %v1141
      %v1967 = vadd.f32 %v1725, %v1147
      %v1968 = vadd.f32 %v1728, %v1151
      %v1969 = vadd.f32 %v1733, %v1157
      %v1970 = vadd.f32 %v1736, %v1161
      %v1971 = vadd.f32 %v1741, %v1167
      %v1972 = vadd.f32 %v1744, %v1171
      %v1973 = vadd.f32 %v1749, %v1177
      %v1974 = vadd.f32 %v1752, %v1181
      %v1975 = vadd.f32 %v1757, %v1187
      %v1976 = vadd.f32 %v1760, %v1191
      %v1977 = vadd.f32 %v1765, %v1197
      %v1978 = vadd.f32 %v1768, %v1201
      %v1979 = vadd.f32 %v1773, %v1207
      %v1980 = vadd.f32 %v1776, %v1211
      %v1981 = vadd.f32 %v1781, %v1217
      %v1982 = vadd.f32 %v1784, %v1221
      %v1983 = vadd.f32 %v1789, %v1227
      %v1984 = vadd.f32 %v1792, %v1231
      %v1985 = vadd.f32 %v1797, %v1237
      %v1986 = vadd.f32 %v1800, %v1241
      %v1987 = vadd.f32 %v1805, %v1247
      %v1988 = vadd.f32 %v1808, %v1251
      %v1989 = vadd.f32 %v1813, %v1257
      %v1990 = vadd.f32 %v1816, %v1261
      %v1991 = vadd.f32 %v1821, %v1267
      %v1992 = vadd.f32 %v1824, %v1271
      %v1993 = vadd.f32 %v1829, %v1277
      %v1994 = vadd.f32 %v1832, %v1281
      %v1995 = vadd.f32 %v1837, %v1287
      %v1996 = vadd.f32 %v1840, %v1291
      %v1997 = vadd.f32 %v1845, %v1297
      %v1998 = vadd.f32 %v1848, %v1301
      %v1999 = vadd.f32 %v1853, %v1307
      %v2000 = vadd.f32 %v1856, %v1311
      %v2001 = vadd.f32 %v1861, %v1317
      %v2002 = vadd.f32 %v1864, %v1321
      %v2003 = vadd.f32 %v1869, %v1327
      %v2004 = vadd.f32 %v1872, %v1331
      %v2005 = vadd.f32 %v1877, %v1337
      %v2006 = vadd.f32 %v1880, %v1341
      %v2007 = vadd.f32 %v1885, %v1347
      %v2008 = vadd.f32 %v1888, %v1351
      %v2009 = vadd.f32 %v1893, %v1357
      %v2010 = vadd.f32 %v1896, %v1361
      %v2011 = vadd.f32 %v1901, %v1367
      %v2012 = vadd.f32 %v1904, %v1371
      %v2013 = vadd.f32 %v1909, %v1377
      %v2014 = vadd.f32 %v1912, %v1381
      %v2015 = vadd.f32 %v1917, %v1387
      %v2016 = vadd.f32 %v1920, %v1391
      %v2017 = vadd.f32 %v1925, %v1397
      %v2018 = vadd.f32 %v1928, %v1401
      %v2019 = vadd.f32 %v1933, %v1407
      %v2020 = vadd.f32 %v1936, %v1411
      %v2021 = vadd.f32 %v1941, %v1417
      %v2022 = vadd.f32 %v1944, %v1421
      %v2023 = vadd.f32 %v1949, %v1427
      %v2024 = vadd.f32 %v1952, %v1431
      %v2025 = vadd.f32 %v1957, %v1437
      %v2026 = vadd.f32 %v1960, %v1441
      %v2027 = vld [vmem:[%s5] sm:$0x1]
      %v2029 = vlaneseq
      %v2030 = vshrl.u32 %v2029, 7
      %v2031 = vsub.s32 0, %v2030
      %v2032 = vrot.slane %v2027, %v2031
      %v2034 = vadd.f32 %v1963, %v2032
      %v2035 = vadd.f32 %v1964, %v2032
      %v2036 = vadd.f32 %v1965, %v2032
      %v2037 = vadd.f32 %v1966, %v2032
      %v2038 = vadd.f32 %v1967, %v2032
      %v2039 = vadd.f32 %v1968, %v2032
      %v2040 = vadd.f32 %v1969, %v2032
      %v2041 = vadd.f32 %v1970, %v2032
      %v2042 = vadd.f32 %v1971, %v2032
      %v2043 = vadd.f32 %v1972, %v2032
      %v2044 = vadd.f32 %v1973, %v2032
      %v2045 = vadd.f32 %v1974, %v2032
      %v2046 = vadd.f32 %v1975, %v2032
      %v2047 = vadd.f32 %v1976, %v2032
      %v2048 = vadd.f32 %v1977, %v2032
      %v2049 = vadd.f32 %v1978, %v2032
      %v2050 = vadd.f32 %v1979, %v2032
      %v2051 = vadd.f32 %v1980, %v2032
      %v2052 = vadd.f32 %v1981, %v2032
      %v2053 = vadd.f32 %v1982, %v2032
      %v2054 = vadd.f32 %v1983, %v2032
      %v2055 = vadd.f32 %v1984, %v2032
      %v2056 = vadd.f32 %v1985, %v2032
      %v2057 = vadd.f32 %v1986, %v2032
      %v2058 = vadd.f32 %v1987, %v2032
      %v2059 = vadd.f32 %v1988, %v2032
      %v2060 = vadd.f32 %v1989, %v2032
      %v2061 = vadd.f32 %v1990, %v2032
      %v2062 = vadd.f32 %v1991, %v2032
      %v2063 = vadd.f32 %v1992, %v2032
      %v2064 = vadd.f32 %v1993, %v2032
      %v2065 = vadd.f32 %v1994, %v2032
      %v2066 = vadd.f32 %v1995, %v2032
      %v2067 = vadd.f32 %v1996, %v2032
      %v2068 = vadd.f32 %v1997, %v2032
      %v2069 = vadd.f32 %v1998, %v2032
      %v2070 = vadd.f32 %v1999, %v2032
      %v2071 = vadd.f32 %v2000, %v2032
      %v2072 = vadd.f32 %v2001, %v2032
      %v2073 = vadd.f32 %v2002, %v2032
      %v2074 = vadd.f32 %v2003, %v2032
      %v2075 = vadd.f32 %v2004, %v2032
      %v2076 = vadd.f32 %v2005, %v2032
      %v2077 = vadd.f32 %v2006, %v2032
      %v2078 = vadd.f32 %v2007, %v2032
      %v2079 = vadd.f32 %v2008, %v2032
      %v2080 = vadd.f32 %v2009, %v2032
      %v2081 = vadd.f32 %v2010, %v2032
      %v2082 = vadd.f32 %v2011, %v2032
      %v2083 = vadd.f32 %v2012, %v2032
      %v2084 = vadd.f32 %v2013, %v2032
      %v2085 = vadd.f32 %v2014, %v2032
      %v2086 = vadd.f32 %v2015, %v2032
      %v2087 = vadd.f32 %v2016, %v2032
      %v2088 = vadd.f32 %v2017, %v2032
      %v2089 = vadd.f32 %v2018, %v2032
      %v2090 = vadd.f32 %v2019, %v2032
      %v2091 = vadd.f32 %v2020, %v2032
      %v2092 = vadd.f32 %v2021, %v2032
      %v2093 = vadd.f32 %v2022, %v2032
      %v2094 = vadd.f32 %v2023, %v2032
      %v2095 = vadd.f32 %v2024, %v2032
      %v2096 = vadd.f32 %v2025, %v2032
      %v2097 = vadd.f32 %v2026, %v2032
      %vm2098 = vcmask 130048
      %2099 = vst.msk [vmem:[%s253] sm:$0xff] %vm2098, %v2034
      %2100 = vst.msk [vmem:[%s253 + $0x8] sm:$0xff] %vm2098, %v2035
      %2101 = vst.msk [vmem:[%s253 + $0x10] sm:$0xff] %vm2098, %v2036
      %2102 = vst.msk [vmem:[%s253 + $0x18] sm:$0xff] %vm2098, %v2037
      %2103 = vst.msk [vmem:[%s253 + $0x20] sm:$0xff] %vm2098, %v2038
      %2104 = vst.msk [vmem:[%s253 + $0x28] sm:$0xff] %vm2098, %v2039
      %2105 = vst.msk [vmem:[%s253 + $0x30] sm:$0xff] %vm2098, %v2040
      %2106 = vst.msk [vmem:[%s253 + $0x38] sm:$0xff] %vm2098, %v2041
      %2107 = vst.msk [vmem:[%s253 + $0x40] sm:$0xff] %vm2098, %v2042
      %2108 = vst.msk [vmem:[%s253 + $0x48] sm:$0xff] %vm2098, %v2043
      %2109 = vst.msk [vmem:[%s253 + $0x50] sm:$0xff] %vm2098, %v2044
      %2110 = vst.msk [vmem:[%s253 + $0x58] sm:$0xff] %vm2098, %v2045
      %2111 = vst.msk [vmem:[%s253 + $0x60] sm:$0xff] %vm2098, %v2046
      %2112 = vst.msk [vmem:[%s253 + $0x68] sm:$0xff] %vm2098, %v2047
      %2113 = vst.msk [vmem:[%s253 + $0x70] sm:$0xff] %vm2098, %v2048
      %2114 = vst.msk [vmem:[%s253 + $0x78] sm:$0xff] %vm2098, %v2049
      %2115 = vst.msk [vmem:[%s253 + $0x80] sm:$0xff] %vm2098, %v2050
      %2116 = vst.msk [vmem:[%s253 + $0x88] sm:$0xff] %vm2098, %v2051
      %2117 = vst.msk [vmem:[%s253 + $0x90] sm:$0xff] %vm2098, %v2052
      %2118 = vst.msk [vmem:[%s253 + $0x98] sm:$0xff] %vm2098, %v2053
      %2119 = vst.msk [vmem:[%s253 + $0xa0] sm:$0xff] %vm2098, %v2054
      %2120 = vst.msk [vmem:[%s253 + $0xa8] sm:$0xff] %vm2098, %v2055
      %2121 = vst.msk [vmem:[%s253 + $0xb0] sm:$0xff] %vm2098, %v2056
      %2122 = vst.msk [vmem:[%s253 + $0xb8] sm:$0xff] %vm2098, %v2057
      %2123 = vst.msk [vmem:[%s253 + $0xc0] sm:$0xff] %vm2098, %v2058
      %2124 = vst.msk [vmem:[%s253 + $0xc8] sm:$0xff] %vm2098, %v2059
      %2125 = vst.msk [vmem:[%s253 + $0xd0] sm:$0xff] %vm2098, %v2060
      %2126 = vst.msk [vmem:[%s253 + $0xd8] sm:$0xff] %vm2098, %v2061
      %2127 = vst.msk [vmem:[%s253 + $0xe0] sm:$0xff] %vm2098, %v2062
      %2128 = vst.msk [vmem:[%s253 + $0xe8] sm:$0xff] %vm2098, %v2063
      %2129 = vst.msk [vmem:[%s253 + $0xf0] sm:$0xff] %vm2098, %v2064
      %2130 = vst.msk [vmem:[%s253 + $0xf8] sm:$0xff] %vm2098, %v2065
      %2131 = vst.msk [vmem:[%s253 + $0x100] sm:$0xff] %vm2098, %v2066
      %2132 = vst.msk [vmem:[%s253 + $0x108] sm:$0xff] %vm2098, %v2067
      %2133 = vst.msk [vmem:[%s253 + $0x110] sm:$0xff] %vm2098, %v2068
      %2134 = vst.msk [vmem:[%s253 + $0x118] sm:$0xff] %vm2098, %v2069
      %2135 = vst.msk [vmem:[%s253 + $0x120] sm:$0xff] %vm2098, %v2070
      %2136 = vst.msk [vmem:[%s253 + $0x128] sm:$0xff] %vm2098, %v2071
      %2137 = vst.msk [vmem:[%s253 + $0x130] sm:$0xff] %vm2098, %v2072
      %2138 = vst.msk [vmem:[%s253 + $0x138] sm:$0xff] %vm2098, %v2073
      %2139 = vst.msk [vmem:[%s253 + $0x140] sm:$0xff] %vm2098, %v2074
      %2140 = vst.msk [vmem:[%s253 + $0x148] sm:$0xff] %vm2098, %v2075
      %2141 = vst.msk [vmem:[%s253 + $0x150] sm:$0xff] %vm2098, %v2076
      %2142 = vst.msk [vmem:[%s253 + $0x158] sm:$0xff] %vm2098, %v2077
      %2143 = vst.msk [vmem:[%s253 + $0x160] sm:$0xff] %vm2098, %v2078
      %2144 = vst.msk [vmem:[%s253 + $0x168] sm:$0xff] %vm2098, %v2079
      %2145 = vst.msk [vmem:[%s253 + $0x170] sm:$0xff] %vm2098, %v2080
      %2146 = vst.msk [vmem:[%s253 + $0x178] sm:$0xff] %vm2098, %v2081
      %2147 = vst.msk [vmem:[%s253 + $0x180] sm:$0xff] %vm2098, %v2082
      %2148 = vst.msk [vmem:[%s253 + $0x188] sm:$0xff] %vm2098, %v2083
      %2149 = vst.msk [vmem:[%s253 + $0x190] sm:$0xff] %vm2098, %v2084
      %2150 = vst.msk [vmem:[%s253 + $0x198] sm:$0xff] %vm2098, %v2085
      %2151 = vst.msk [vmem:[%s253 + $0x1a0] sm:$0xff] %vm2098, %v2086
      %2152 = vst.msk [vmem:[%s253 + $0x1a8] sm:$0xff] %vm2098, %v2087
      %2153 = vst.msk [vmem:[%s253 + $0x1b0] sm:$0xff] %vm2098, %v2088
      %2154 = vst.msk [vmem:[%s253 + $0x1b8] sm:$0xff] %vm2098, %v2089
      %2155 = vst.msk [vmem:[%s253 + $0x1c0] sm:$0xff] %vm2098, %v2090
      %2156 = vst.msk [vmem:[%s253 + $0x1c8] sm:$0xff] %vm2098, %v2091
      %2157 = vst.msk [vmem:[%s253 + $0x1d0] sm:$0xff] %vm2098, %v2092
      %2158 = vst.msk [vmem:[%s253 + $0x1d8] sm:$0xff] %vm2098, %v2093
      %2159 = vst.msk [vmem:[%s253 + $0x1e0] sm:$0xff] %vm2098, %v2094
      %2160 = vst.msk [vmem:[%s253 + $0x1e8] sm:$0xff] %vm2098, %v2095
      %2161 = vst.msk [vmem:[%s253 + $0x1f0] sm:$0xff] %vm2098, %v2096
      %2162 = vst.msk [vmem:[%s253 + $0x1f8] sm:$0xff] %vm2098, %v2097
      %s2163 = smul.u32 64, %s17
      %p2164 = scmp.lt.s32.totalorder %s2163, 127
      %s2165 = scalar_select %p2164, %s2163, 127
      %s2166 = smul.addr %s2165, 8
      %s2167 = scalar_lea.vmem %s6, %s2166
      // Predicated region
      $region45: #{tpu_custom_call.1} parent=43 // pred_check
        %p2168 = pneg %p166
      $region46: #{tpu_custom_call.1} parent=43 // pred_check_branch
        %2170 = sbr.rel (%p2168) target = $region48
      $region47: #{tpu_custom_call.1} parent=43 // pred_region
        %s2171 = smul.u32 64, %s17
      $region48: #{tpu_custom_call.1} parent=43 // pred_fallthru
        _
    $region44: #{tpu_custom_call.1} parent=5 // pred_fallthru
      _
    %p2172 = scmp.le.s32.totalorder 2, %s12
    // Predicated region
    $region49: #{tpu_custom_call.1} parent=5 // pred_check
      %p2173 = pneg %p2172
    $region50: #{tpu_custom_call.1} parent=5 // pred_check_branch
      %2175 = sbr.rel (%p2173) target = $region52
    $region51: #{tpu_custom_call.1} parent=5 // pred_region
      %s2176 = ssub.s32 %s12, 2
      // Predicated region
      $region53: #{tpu_custom_call.1} parent=51 // pred_check
        %p2177 = pneg %p172
      $region54: #{tpu_custom_call.1} parent=51 // pred_check_branch
        %2179 = sbr.rel (%p2177) target = $region56
      $region55: #{tpu_custom_call.1} parent=51 // pred_region
        %s2180 = smul.u32 64, %s18
        %p2181 = scmp.lt.s32.totalorder %s2180, 127
        %s2182 = scalar_select %p2181, %s2180, 127
        %s2183 = smul.addr %s2182, 8
        %s2184 = scalar_lea.vmem %s6, %s2183
      $region56: #{tpu_custom_call.1} parent=51 // pred_fallthru
        _
    $region52: #{tpu_custom_call.1} parent=5 // pred_fallthru
      _
  $region6: #{tpu_custom_call.1} parent=0 // loop_footer
    %s16 = sadd.s32 1, %s12
  $region7: #{tpu_custom_call.1} parent=0 // loop_footer_branch
    %11 = sbr.rel target = $region3
  $region8: #{tpu_custom_call.1} parent=0 // loop_exit
    _

</llo_original>
